<compile_context>
chip_gen: v7x
topology: tpu7x:2x2x1
jax: 0.10.0
libtpu: 0.0.40
codegen_flags: <defaults>
</compile_context>

<pallas_src>
import functools

import jax
import jax.numpy as jnp
from jax.experimental import pallas as pl
from jax.experimental.pallas import tpu as pltpu

LANE = 128  # vreg lane width; all model dims are 128 so every tile is lane-dense.


def _round_up(x, m):
    return (x + m - 1) // m * m


def news_recommender_kernel(
    ids_ref,    # (TB, S)          int32  history article ids
    dense_ref,  # (TB, LANE)       f32    packed per-row stream: [feat(F) | gate(S) | 0..]
    tab_ref,    # (V, D)           bf16   embedding table (VMEM resident)
    whf_ref,    # (2L, 2L)         bf16   block-diag fused [w_h ; w_f] first layer
    wu_ref,     # (2L, L)          bf16   fusion layer 1 weight (resident)
    small_ref,  # (4, 2L)          f32    rows: [b_h|b_f], [b_u|0], [w_o|0], [b_o,0..]
    out_ref,    # (1, TB)          f32    scores, lane-major row
    *, feat_dim,
):
    tb, seq = ids_ref.shape
    vocab = tab_ref.shape[0]

    ids = ids_ref[...]                                      # (TB, S) int32
    dense = dense_ref[...]                                  # (TB, LANE) f32
    gate = dense[:, feat_dim:feat_dim + seq]                # (TB, S) f32

    # --- historic_model: fused gather + gated sum ------------------------
    # pooled[b] = sum_s gate[b,s] * table[ids[b,s]]
    #           = (sum_s gate[b,s] * onehot(ids[b,s])) @ table
    # Scatter the gates into vocab slots with f32 VPU math (native on v5e too),
    # then one (TB, V) @ (V, D) MXU dot with f32 accumulation.
    lane_ids = jax.lax.broadcasted_iota(jnp.int32, (tb, vocab), 1)
    scat = jnp.zeros((tb, vocab), jnp.float32)
    for s in range(seq):                                    # S is small & static
        hit = ids[:, s:s + 1] == lane_ids                   # (TB, V) bool
        scat = scat + jnp.where(hit, gate[:, s:s + 1], 0.0)

    pooled = jnp.dot(scat.astype(jnp.bfloat16), tab_ref[...],
                     preferred_element_type=jnp.float32)    # (TB, D) f32 acc
    denom = jnp.maximum(jnp.sum(gate, axis=1, keepdims=True), 1e-6)
    pooled = pooled * pl.reciprocal(denom, approx=True)     # EUP slot, not VALU

    # --- fused historic/feature projections: one 256-wide MXU dot --------
    small = small_ref[...]                                  # (4, 2L) f32
    b_hf = small[0:1, :]                                    # (1, 2L)
    b_u = small[1:2, :LANE]                                 # (1, L)
    w_o = small[2:3, :LANE]                                 # (1, L)
    b_o = small[3:4, 0:1]                                   # (1, 1)

    # x = [pooled | feat(+gate columns)]; the gate/zero columns of `dense`
    # multiply zero rows of whf, so only the real features contribute.
    x = jnp.concatenate(
        [pooled.astype(jnp.bfloat16), dense.astype(jnp.bfloat16)], axis=-1)  # (TB, 2L)
    e_hf = jnp.maximum(
        jnp.dot(x, whf_ref[...], preferred_element_type=jnp.float32) + b_hf,
        0.0,
    )                                                       # (TB, 2L) = [e_H | e_L]

    # --- fusion_network ----------------------------------------------------
    hidden = jnp.maximum(
        jnp.dot(e_hf.astype(jnp.bfloat16), wu_ref[...],
                preferred_element_type=jnp.float32) + b_u,
        0.0,
    )                                                       # (TB, L) f32

    # Output head: VPU multiply by w_o, XLU transpose, sublane reduce ->
    # a lane-major (1, TB) score row (4 B/row HBM write instead of 512 B).
    hw = hidden * w_o                                       # (TB, L) f32
    score = jnp.sum(jnp.transpose(hw), axis=0, keepdims=True) + b_o   # (1, TB)
    out_ref[...] = score.astype(out_ref.dtype)


def news_recommender_forward(params, histories, behaviors, target_articles,
                             tile_b=512):
    """Feature assembly in JAX glue, then one gridded fused Pallas call."""
    ids = histories["article_ids"].astype(jnp.int32)                   # (B, S)
    read_times = histories["read_times"].astype(jnp.float32)           # (B, S)
    scroll_pct = histories["scroll_percentages"].astype(jnp.float32)   # (B, S)
    gate = read_times * scroll_pct                                     # (B, S)

    # Per-behavior scalar features (the pandas .iloc loop in the original code).
    # TODO(synk): pandas DataFrame row indexing has no Pallas equivalent; the
    # equivalent scalar features are assembled here as a dense (B, F) matrix.
    imp_id = behaviors["impression_id"].astype(jnp.float32)
    sess_id = behaviors["session_id"].astype(jnp.float32)
    imp_time = behaviors["impression_time"].astype(jnp.float32)
    pub_time = target_articles["published_time"].astype(jnp.float32)
    art_id = target_articles["article_id"].astype(jnp.float32)
    dt = imp_time - pub_time
    feat = jnp.stack(
        [imp_id / 1e4, sess_id / 1e4, imp_time / 1e5, pub_time / 1e5,
         dt / 1e5, art_id / 1e3, jnp.sin(imp_time / 1e4), jnp.cos(imp_time / 1e4)],
        axis=-1,
    ).astype(jnp.float32)                                               # (B, F=8)

    B, S = ids.shape
    V, D = params["embedding"].shape
    F = feat.shape[1]
    DH = params["w_h"].shape[1]
    DL = params["w_f"].shape[1]
    H = params["w_u"].shape[1]
    assert D == LANE and DH == LANE and DL == LANE and H == LANE, \
        "model dims must be 128-lane"
    assert F + S <= LANE, "feat+gate must fit in one 128-lane row"
    # TODO(synk): the embedding table is kept VMEM-resident (fine for demo-size
    # vocab); for production vocabularies switch to scalar-prefetched ids +
    # manual make_async_copy row DMAs from an HBM-resident table (pl.ANY).

    # Single packed lane-dense f32 stream per row: [feat | gate | zeros].
    dense = jnp.zeros((B, LANE), jnp.float32)
    dense = dense.at[:, :F].set(feat)
    dense = dense.at[:, F:F + S].set(gate)

    # Batch tile: multiple of 128 so MXU M is full, transposes/stores are
    # lane-dense, and multi-tile grids keep TB % 128 == 0.
    TB = _round_up(min(int(tile_b), max(int(B), 1)), LANE)
    B_pad = _round_up(B, TB)
    pad = B_pad - B
    if pad:
        ids = jnp.pad(ids, ((0, pad), (0, 0)))
        dense = jnp.pad(dense, ((0, pad), (0, 0)))

    table = params["embedding"].astype(jnp.bfloat16)                    # (V, D)

    # Block-diagonal fused first-layer weight: one (2L, 2L) bf16 matrix.
    w_hf = jnp.zeros((2 * LANE, 2 * LANE), jnp.float32)
    w_hf = w_hf.at[:D, :DH].set(params["w_h"])
    w_hf = w_hf.at[LANE:LANE + F, LANE:].set(params["w_f"])
    w_hf = w_hf.astype(jnp.bfloat16)
    w_u = params["w_u"].astype(jnp.bfloat16)                            # (2L, L)

    # All tiny params (biases + output head) packed into one (4, 2L) f32 tile.
    small = jnp.zeros((4, 2 * LANE), jnp.float32)
    small = small.at[0, :LANE].set(params["b_h"][0])
    small = small.at[0, LANE:].set(params["b_f"][0])
    small = small.at[1, :LANE].set(params["b_u"][0])
    small = small.at[2, :LANE].set(params["w_o"][:, 0])
    small = small.at[3, 0].set(params["b_o"][0, 0])

    grid = (B_pad // TB,)
    kernel = functools.partial(news_recommender_kernel, feat_dim=F)

    in_specs = [
        pl.BlockSpec((TB, S), lambda i: (i, 0)),              # ids (streamed)
        pl.BlockSpec((TB, LANE), lambda i: (i, 0)),           # dense (streamed)
        pl.BlockSpec((V, D), lambda i: (0, 0)),               # embedding table (resident)
        pl.BlockSpec((2 * LANE, 2 * LANE), lambda i: (0, 0)), # w_hf (resident)
        pl.BlockSpec((2 * LANE, LANE), lambda i: (0, 0)),     # w_u (resident)
        pl.BlockSpec((4, 2 * LANE), lambda i: (0, 0)),        # biases / w_o (resident)
    ]
    out_specs = pl.BlockSpec((1, TB), lambda i: (0, i))

    flops = 2 * B_pad * (S * V + V * D + (2 * LANE) * (2 * LANE)
                         + (2 * LANE) * LANE + LANE)
    bytes_accessed = (
        B_pad * (S * 4 + LANE * 4 + 4)                         # ids + dense + score
        + V * D * 2                                            # bf16 table (once)
        + ((2 * LANE) * (2 * LANE) + (2 * LANE) * LANE) * 2    # bf16 weights (once)
        + 4 * (2 * LANE) * 4                                   # small pack
    )

    out = pl.pallas_call(
        kernel,
        out_shape=jax.ShapeDtypeStruct((1, B_pad), jnp.float32),
        grid_spec=pltpu.PrefetchScalarGridSpec(
            num_scalar_prefetch=0,
            grid=grid,
            in_specs=in_specs,
            out_specs=out_specs,
        ),
        compiler_params=pltpu.CompilerParams(
            dimension_semantics=("parallel",),
            vmem_limit_bytes=32 * 1024 * 1024,
        ),
        cost_estimate=pl.CostEstimate(
            flops=int(flops),
            transcendentals=int(B_pad),
            bytes_accessed=int(bytes_accessed),
        ),
    )(ids, dense, table, w_hf, w_u, small)

    return out[0, :B][:, None]                                 # (B, 1) f32


def init_params(key, vocab=128, d_emb=128, d_h=128, feat_dim=8, d_l=128, hidden=128):
    ks = jax.random.split(key, 8)
    scale = 0.1
    return {
        # Embedding table stored bf16 (it is VMEM-resident inside the kernel).
        "embedding": (scale * jax.random.normal(ks[0], (vocab, d_emb))).astype(jnp.bfloat16),
        "w_h": scale * jax.random.normal(ks[1], (d_emb, d_h), jnp.float32),
        "b_h": jnp.zeros((1, d_h), jnp.float32),
        "w_f": scale * jax.random.normal(ks[2], (feat_dim, d_l), jnp.float32),
        "b_f": jnp.zeros((1, d_l), jnp.float32),
        # Fusion layer 1 stored as one stacked (d_h + d_l, hidden) concat weight.
        "w_u": scale * jax.random.normal(ks[3], (d_h + d_l, hidden), jnp.float32),
        "b_u": jnp.zeros((1, hidden), jnp.float32),
        "w_o": scale * jax.random.normal(ks[4], (hidden, 1), jnp.float32),
        "b_o": jnp.zeros((1, 1), jnp.float32),
    }


if __name__ == "__main__":
    key = jax.random.PRNGKey(0)
    B, S, VOCAB = 64, 8, 128
    params = init_params(key, vocab=VOCAB)

    k1, k2, k3, k4, k5, k6, k7 = jax.random.split(key, 7)
    histories = {
        "article_ids": jax.random.randint(k1, (B, S), 0, VOCAB),
        "read_times": jax.random.uniform(k2, (B, S), jnp.float32, 0.0, 120.0),
        "scroll_percentages": jax.random.uniform(k3, (B, S), jnp.float32, 0.0, 1.0),
    }
    behaviors = {
        "impression_id": jax.random.randint(k4, (B,), 0, 10000),
        "session_id": jax.random.randint(k5, (B,), 0, 10000),
        "impression_time": jax.random.uniform(k6, (B,), jnp.float32, 0.0, 1e5),
    }
    target_articles = {
        "article_id": jax.random.randint(k7, (B,), 0, VOCAB),
        "published_time": jax.random.uniform(key, (B,), jnp.float32, 0.0, 1e5),
    }

    out = news_recommender_forward(params, histories, behaviors, target_articles)
    out = jax.block_until_ready(out)
    assert out.shape == (B, 1) and out.dtype == jnp.float32
    assert bool(jnp.all(jnp.isfinite(out)))
    print("KERNEL_OK")
</pallas_src>

<mosaic_0001>
module attributes {stable_mosaic.version = 11 : i64} {
  func.func @news_recommender_kernel(%arg0: i32, %arg1: memref<128x8xi32, #tpu.memory_space<vmem>>, %arg2: memref<128x128xf32, #tpu.memory_space<vmem>>, %arg3: memref<128x128xbf16, #tpu.memory_space<vmem>>, %arg4: memref<256x256xbf16, #tpu.memory_space<vmem>>, %arg5: memref<256x128xbf16, #tpu.memory_space<vmem>>, %arg6: memref<4x256xf32, #tpu.memory_space<vmem>>, %arg7: memref<1x128xf32, #tpu.memory_space<vmem>>) attributes {dimension_semantics = [#tpu.dimension_semantics<parallel>], iteration_bounds = array<i64: 1>, scalar_prefetch = 0 : i64, scratch_operands = 0 : i64, tpu.core_type = #tpu.core_type<tc>, window_params = [{transform_indices = @transform_0, window_bounds = array<i64: 128, 8>}, {transform_indices = @transform_1, window_bounds = array<i64: 128, 128>}, {pipeline_mode = #tpu.pipeline_mode<synchronous>, transform_indices = @transform_2, window_bounds = array<i64: 128, 128>}, {pipeline_mode = #tpu.pipeline_mode<synchronous>, transform_indices = @transform_3, window_bounds = array<i64: 256, 256>}, {pipeline_mode = #tpu.pipeline_mode<synchronous>, transform_indices = @transform_4, window_bounds = array<i64: 256, 128>}, {pipeline_mode = #tpu.pipeline_mode<synchronous>, transform_indices = @transform_5, window_bounds = array<i64: 4, 256>}, {transform_indices = @transform_6, window_bounds = array<i64: 1, 128>}]} {
    %c0 = arith.constant 0 : index
    %c0_0 = arith.constant 0 : index
    %0 = vector.load %arg1[%c0, %c0_0] : memref<128x8xi32, #tpu.memory_space<vmem>>, vector<128x8xi32>
    %c0_1 = arith.constant 0 : index
    %c0_2 = arith.constant 0 : index
    %1 = vector.load %arg2[%c0_1, %c0_2] : memref<128x128xf32, #tpu.memory_space<vmem>>, vector<128x128xf32>
    %2 = vector.extract_strided_slice %1 {offsets = [0, 8], sizes = [128, 8], strides = [1, 1]} : vector<128x128xf32> to vector<128x8xf32>
    %3 = tpu.iota {dimensions = array<i32: 1>} : vector<128x128xi32>
    %cst = arith.constant 0.000000e+00 : f32
    %4 = vector.broadcast %cst : f32 to vector<128x128xf32>
    %5 = vector.extract_strided_slice %0 {offsets = [0, 0], sizes = [128, 1], strides = [1, 1]} : vector<128x8xi32> to vector<128x1xi32>
    %6 = vector.broadcast %5 : vector<128x1xi32> to vector<128x128xi32>
    %7 = arith.cmpi eq, %6, %3 : vector<128x128xi32>
    %8 = vector.extract_strided_slice %2 {offsets = [0, 0], sizes = [128, 1], strides = [1, 1]} : vector<128x8xf32> to vector<128x1xf32>
    %cst_3 = arith.constant 0.000000e+00 : f32
    %9 = vector.shape_cast %8 : vector<128x1xf32> to vector<128x1xf32>
    %10 = vector.broadcast %9 : vector<128x1xf32> to vector<128x128xf32>
    %11 = vector.broadcast %cst_3 : f32 to vector<128x128xf32>
    %12 = arith.select %7, %10, %11 : vector<128x128xi1>, vector<128x128xf32>
    %13 = arith.addf %4, %12 : vector<128x128xf32>
    %14 = vector.extract_strided_slice %0 {offsets = [0, 1], sizes = [128, 1], strides = [1, 1]} : vector<128x8xi32> to vector<128x1xi32>
    %15 = vector.broadcast %14 : vector<128x1xi32> to vector<128x128xi32>
    %16 = arith.cmpi eq, %15, %3 : vector<128x128xi32>
    %17 = vector.extract_strided_slice %2 {offsets = [0, 1], sizes = [128, 1], strides = [1, 1]} : vector<128x8xf32> to vector<128x1xf32>
    %cst_4 = arith.constant 0.000000e+00 : f32
    %18 = vector.shape_cast %17 : vector<128x1xf32> to vector<128x1xf32>
    %19 = vector.broadcast %18 : vector<128x1xf32> to vector<128x128xf32>
    %20 = vector.broadcast %cst_4 : f32 to vector<128x128xf32>
    %21 = arith.select %16, %19, %20 : vector<128x128xi1>, vector<128x128xf32>
    %22 = arith.addf %13, %21 : vector<128x128xf32>
    %23 = vector.extract_strided_slice %0 {offsets = [0, 2], sizes = [128, 1], strides = [1, 1]} : vector<128x8xi32> to vector<128x1xi32>
    %24 = vector.broadcast %23 : vector<128x1xi32> to vector<128x128xi32>
    %25 = arith.cmpi eq, %24, %3 : vector<128x128xi32>
    %26 = vector.extract_strided_slice %2 {offsets = [0, 2], sizes = [128, 1], strides = [1, 1]} : vector<128x8xf32> to vector<128x1xf32>
    %cst_5 = arith.constant 0.000000e+00 : f32
    %27 = vector.shape_cast %26 : vector<128x1xf32> to vector<128x1xf32>
    %28 = vector.broadcast %27 : vector<128x1xf32> to vector<128x128xf32>
    %29 = vector.broadcast %cst_5 : f32 to vector<128x128xf32>
    %30 = arith.select %25, %28, %29 : vector<128x128xi1>, vector<128x128xf32>
    %31 = arith.addf %22, %30 : vector<128x128xf32>
    %32 = vector.extract_strided_slice %0 {offsets = [0, 3], sizes = [128, 1], strides = [1, 1]} : vector<128x8xi32> to vector<128x1xi32>
    %33 = vector.broadcast %32 : vector<128x1xi32> to vector<128x128xi32>
    %34 = arith.cmpi eq, %33, %3 : vector<128x128xi32>
    %35 = vector.extract_strided_slice %2 {offsets = [0, 3], sizes = [128, 1], strides = [1, 1]} : vector<128x8xf32> to vector<128x1xf32>
    %cst_6 = arith.constant 0.000000e+00 : f32
    %36 = vector.shape_cast %35 : vector<128x1xf32> to vector<128x1xf32>
    %37 = vector.broadcast %36 : vector<128x1xf32> to vector<128x128xf32>
    %38 = vector.broadcast %cst_6 : f32 to vector<128x128xf32>
    %39 = arith.select %34, %37, %38 : vector<128x128xi1>, vector<128x128xf32>
    %40 = arith.addf %31, %39 : vector<128x128xf32>
    %41 = vector.extract_strided_slice %0 {offsets = [0, 4], sizes = [128, 1], strides = [1, 1]} : vector<128x8xi32> to vector<128x1xi32>
    %42 = vector.broadcast %41 : vector<128x1xi32> to vector<128x128xi32>
    %43 = arith.cmpi eq, %42, %3 : vector<128x128xi32>
    %44 = vector.extract_strided_slice %2 {offsets = [0, 4], sizes = [128, 1], strides = [1, 1]} : vector<128x8xf32> to vector<128x1xf32>
    %cst_7 = arith.constant 0.000000e+00 : f32
    %45 = vector.shape_cast %44 : vector<128x1xf32> to vector<128x1xf32>
    %46 = vector.broadcast %45 : vector<128x1xf32> to vector<128x128xf32>
    %47 = vector.broadcast %cst_7 : f32 to vector<128x128xf32>
    %48 = arith.select %43, %46, %47 : vector<128x128xi1>, vector<128x128xf32>
    %49 = arith.addf %40, %48 : vector<128x128xf32>
    %50 = vector.extract_strided_slice %0 {offsets = [0, 5], sizes = [128, 1], strides = [1, 1]} : vector<128x8xi32> to vector<128x1xi32>
    %51 = vector.broadcast %50 : vector<128x1xi32> to vector<128x128xi32>
    %52 = arith.cmpi eq, %51, %3 : vector<128x128xi32>
    %53 = vector.extract_strided_slice %2 {offsets = [0, 5], sizes = [128, 1], strides = [1, 1]} : vector<128x8xf32> to vector<128x1xf32>
    %cst_8 = arith.constant 0.000000e+00 : f32
    %54 = vector.shape_cast %53 : vector<128x1xf32> to vector<128x1xf32>
    %55 = vector.broadcast %54 : vector<128x1xf32> to vector<128x128xf32>
    %56 = vector.broadcast %cst_8 : f32 to vector<128x128xf32>
    %57 = arith.select %52, %55, %56 : vector<128x128xi1>, vector<128x128xf32>
    %58 = arith.addf %49, %57 : vector<128x128xf32>
    %59 = vector.extract_strided_slice %0 {offsets = [0, 6], sizes = [128, 1], strides = [1, 1]} : vector<128x8xi32> to vector<128x1xi32>
    %60 = vector.broadcast %59 : vector<128x1xi32> to vector<128x128xi32>
    %61 = arith.cmpi eq, %60, %3 : vector<128x128xi32>
    %62 = vector.extract_strided_slice %2 {offsets = [0, 6], sizes = [128, 1], strides = [1, 1]} : vector<128x8xf32> to vector<128x1xf32>
    %cst_9 = arith.constant 0.000000e+00 : f32
    %63 = vector.shape_cast %62 : vector<128x1xf32> to vector<128x1xf32>
    %64 = vector.broadcast %63 : vector<128x1xf32> to vector<128x128xf32>
    %65 = vector.broadcast %cst_9 : f32 to vector<128x128xf32>
    %66 = arith.select %61, %64, %65 : vector<128x128xi1>, vector<128x128xf32>
    %67 = arith.addf %58, %66 : vector<128x128xf32>
    %68 = vector.extract_strided_slice %0 {offsets = [0, 7], sizes = [128, 1], strides = [1, 1]} : vector<128x8xi32> to vector<128x1xi32>
    %69 = vector.broadcast %68 : vector<128x1xi32> to vector<128x128xi32>
    %70 = arith.cmpi eq, %69, %3 : vector<128x128xi32>
    %71 = vector.extract_strided_slice %2 {offsets = [0, 7], sizes = [128, 1], strides = [1, 1]} : vector<128x8xf32> to vector<128x1xf32>
    %cst_10 = arith.constant 0.000000e+00 : f32
    %72 = vector.shape_cast %71 : vector<128x1xf32> to vector<128x1xf32>
    %73 = vector.broadcast %72 : vector<128x1xf32> to vector<128x128xf32>
    %74 = vector.broadcast %cst_10 : f32 to vector<128x128xf32>
    %75 = arith.select %70, %73, %74 : vector<128x128xi1>, vector<128x128xf32>
    %76 = arith.addf %67, %75 : vector<128x128xf32>
    %77 = arith.truncf %76 : vector<128x128xf32> to vector<128x128xbf16>
    %c0_11 = arith.constant 0 : index
    %c0_12 = arith.constant 0 : index
    %78 = vector.load %arg3[%c0_11, %c0_12] : memref<128x128xbf16, #tpu.memory_space<vmem>>, vector<128x128xbf16>
    %cst_13 = arith.constant dense<0.000000e+00> : vector<128x128xf32>
    %79 = tpu.matmul %77, %78, %cst_13 {dimension_numbers = #tpu.dot_dimension_numbers<[1], [0], [0], [1], [0, 0, 1, 1], [], []>} : vector<128x128xbf16>, vector<128x128xbf16>, vector<128x128xf32> -> vector<128x128xf32>
    %cst_14 = arith.constant dense<0.000000e+00> : vector<128xf32>
    %80 = vector.multi_reduction <add>, %2, %cst_14 [1] : vector<128x8xf32> to vector<128xf32>
    %81 = vector.shape_cast %80 : vector<128xf32> to vector<128x1xf32>
    %cst_15 = arith.constant 9.99999997E-7 : f32
    %82 = vector.broadcast %cst_15 : f32 to vector<128x1xf32>
    %83 = arith.maximumf %81, %82 : vector<128x1xf32>
    %84 = tpu.reciprocal %83 {approx = true} : vector<128x1xf32> -> vector<128x1xf32>
    %85 = vector.broadcast %84 : vector<128x1xf32> to vector<128x128xf32>
    %86 = arith.mulf %79, %85 : vector<128x128xf32>
    %c0_16 = arith.constant 0 : index
    %c0_17 = arith.constant 0 : index
    %87 = vector.load %arg6[%c0_16, %c0_17] : memref<4x256xf32, #tpu.memory_space<vmem>>, vector<4x256xf32>
    %88 = vector.extract_strided_slice %87 {offsets = [0, 0], sizes = [1, 256], strides = [1, 1]} : vector<4x256xf32> to vector<1x256xf32>
    %89 = vector.extract_strided_slice %87 {offsets = [1, 0], sizes = [1, 128], strides = [1, 1]} : vector<4x256xf32> to vector<1x128xf32>
    %90 = vector.extract_strided_slice %87 {offsets = [2, 0], sizes = [1, 128], strides = [1, 1]} : vector<4x256xf32> to vector<1x128xf32>
    %91 = vector.extract_strided_slice %87 {offsets = [3, 0], sizes = [1, 1], strides = [1, 1]} : vector<4x256xf32> to vector<1x1xf32>
    %92 = arith.truncf %86 : vector<128x128xf32> to vector<128x128xbf16>
    %93 = arith.truncf %1 : vector<128x128xf32> to vector<128x128xbf16>
    %94 = tpu.concatenate %92, %93 in 1 : vector<128x128xbf16>, vector<128x128xbf16> -> vector<128x256xbf16>
    %c0_18 = arith.constant 0 : index
    %c0_19 = arith.constant 0 : index
    %95 = vector.load %arg4[%c0_18, %c0_19] : memref<256x256xbf16, #tpu.memory_space<vmem>>, vector<256x256xbf16>
    %cst_20 = arith.constant dense<0.000000e+00> : vector<128x256xf32>
    %96 = tpu.matmul %94, %95, %cst_20 {dimension_numbers = #tpu.dot_dimension_numbers<[1], [0], [0], [1], [0, 0, 1, 1], [], []>} : vector<128x256xbf16>, vector<256x256xbf16>, vector<128x256xf32> -> vector<128x256xf32>
    %97 = vector.broadcast %88 : vector<1x256xf32> to vector<128x256xf32>
    %98 = arith.addf %96, %97 : vector<128x256xf32>
    %cst_21 = arith.constant 0.000000e+00 : f32
    %99 = vector.broadcast %cst_21 : f32 to vector<128x256xf32>
    %100 = arith.maximumf %98, %99 : vector<128x256xf32>
    %101 = arith.truncf %100 : vector<128x256xf32> to vector<128x256xbf16>
    %c0_22 = arith.constant 0 : index
    %c0_23 = arith.constant 0 : index
    %102 = vector.load %arg5[%c0_22, %c0_23] : memref<256x128xbf16, #tpu.memory_space<vmem>>, vector<256x128xbf16>
    %cst_24 = arith.constant dense<0.000000e+00> : vector<128x128xf32>
    %103 = tpu.matmul %101, %102, %cst_24 {dimension_numbers = #tpu.dot_dimension_numbers<[1], [0], [0], [1], [0, 0, 1, 1], [], []>} : vector<128x256xbf16>, vector<256x128xbf16>, vector<128x128xf32> -> vector<128x128xf32>
    %104 = vector.broadcast %89 : vector<1x128xf32> to vector<128x128xf32>
    %105 = arith.addf %103, %104 : vector<128x128xf32>
    %cst_25 = arith.constant 0.000000e+00 : f32
    %106 = vector.broadcast %cst_25 : f32 to vector<128x128xf32>
    %107 = arith.maximumf %105, %106 : vector<128x128xf32>
    %108 = vector.broadcast %90 : vector<1x128xf32> to vector<128x128xf32>
    %109 = arith.mulf %107, %108 : vector<128x128xf32>
    %110 = tpu.transpose %109, [1, 0] : vector<128x128xf32> -> vector<128x128xf32>
    %cst_26 = arith.constant dense<0.000000e+00> : vector<128xf32>
    %111 = vector.multi_reduction <add>, %110, %cst_26 [0] : vector<128x128xf32> to vector<128xf32>
    %112 = vector.shape_cast %111 : vector<128xf32> to vector<1x128xf32>
    %113 = vector.broadcast %91 : vector<1x1xf32> to vector<1x128xf32>
    %114 = arith.addf %112, %113 : vector<1x128xf32>
    %c0_27 = arith.constant 0 : index
    %c0_28 = arith.constant 0 : index
    %115 = vector.load %arg7[%c0_27, %c0_28] : memref<1x128xf32, #tpu.memory_space<vmem>>, vector<1x128xf32>
    tpu.vector_store %arg7[%c0_27, %c0_28], %114 {strides = array<i32>} : memref<1x128xf32, #tpu.memory_space<vmem>>, vector<1x128xf32>,
    return
  }
  func.func @transform_0(%arg0: i32) -> (i32, i32) {
    %c0_i32 = arith.constant 0 : i32
    %c0_i32_0 = arith.constant 0 : i32
    return %arg0, %c0_i32 : i32, i32
  }
  func.func @transform_1(%arg0: i32) -> (i32, i32) {
    %c0_i32 = arith.constant 0 : i32
    %c0_i32_0 = arith.constant 0 : i32
    return %arg0, %c0_i32 : i32, i32
  }
  func.func @transform_2(%arg0: i32) -> (i32, i32) {
    %c0_i32 = arith.constant 0 : i32
    %c0_i32_0 = arith.constant 0 : i32
    %c0_i32_1 = arith.constant 0 : i32
    return %c0_i32, %c0_i32_0 : i32, i32
  }
  func.func @transform_3(%arg0: i32) -> (i32, i32) {
    %c0_i32 = arith.constant 0 : i32
    %c0_i32_0 = arith.constant 0 : i32
    %c0_i32_1 = arith.constant 0 : i32
    return %c0_i32, %c0_i32_0 : i32, i32
  }
  func.func @transform_4(%arg0: i32) -> (i32, i32) {
    %c0_i32 = arith.constant 0 : i32
    %c0_i32_0 = arith.constant 0 : i32
    %c0_i32_1 = arith.constant 0 : i32
    return %c0_i32, %c0_i32_0 : i32, i32
  }
  func.func @transform_5(%arg0: i32) -> (i32, i32) {
    %c0_i32 = arith.constant 0 : i32
    %c0_i32_0 = arith.constant 0 : i32
    %c0_i32_1 = arith.constant 0 : i32
    return %c0_i32, %c0_i32_0 : i32, i32
  }
  func.func @transform_6(%arg0: i32) -> (i32, i32) {
    %c0_i32 = arith.constant 0 : i32
    %c0_i32_0 = arith.constant 0 : i32
    return %c0_i32, %arg0 : i32, i32
  }
}

</mosaic_0001>

<llo_original>
// kernel: tpu_custom_call.1
$region0: #{tpu_custom_call.1}
  #allocation0 [shape = 'u32[]', space=smem, size = 0x4, offset = 0x4, fixed_abs, tag = 'smem constant byte address 0x4 - core index']
  #allocation1 [shape = 'u32[144,128]{1,0:T(1,128)}', space=vmem, size = 0x12000, scoped, tag = 'internal scratch']
  %s0 = inlined_call_operand.vmem [shape: s32[128,8], index: 0, kind: input, shape index: {}]
  %s1 = inlined_call_operand.vmem [shape: f32[128,128], index: 1, kind: input, shape index: {}]
  %s2 = inlined_call_operand.hbm [shape: bf16[128,128], index: 2, kind: input, shape index: {}]
  %s3 = inlined_call_operand.hbm [shape: bf16[256,256], index: 3, kind: input, shape index: {}]
  %s4 = inlined_call_operand.hbm [shape: bf16[256,128], index: 4, kind: input, shape index: {}]
  %s5 = inlined_call_operand.vmem [shape: f32[4,256], index: 5, kind: input, shape index: {}]
  %s6 = inlined_call_operand.hbm [shape: f32[1,128], index: 6, kind: output, shape index: {}]
  %s7 = sld [smem:[#allocation0]]
  $region46: #{tpu_custom_call.1} parent=0
    _
  %s9 = ssub.s32 1, %s7
  %s10 = scalar_select 0, %s9, %s7
  $region1: #{tpu_custom_call.1} parent=0
    #allocation2 [shape = 'u8[32768]{0}', space=vmem, size = 0x8000, scoped, tag = 'input window, operand 2, single buffered']
    #allocation3 [shape = 's32[1]{0}', space=sflag, size = 0x4, scoped, tag = 'scoped memory for tpu_custom_call.1']
    #allocation4 [shape = 's32[1]{0}', space=sflag, size = 0x4, scoped, tag = 'scoped memory for tpu_custom_call.1']
    #allocation5 [shape = 'u8[131072]{0}', space=vmem, size = 0x20000, scoped, tag = 'input window, operand 3, single buffered']
    #allocation6 [shape = 's32[1]{0}', space=sflag, size = 0x4, scoped, tag = 'scoped memory for tpu_custom_call.1']
    #allocation7 [shape = 'u8[65536]{0}', space=vmem, size = 0x10000, scoped, tag = 'input window, operand 4, single buffered']
    #allocation8 [shape = 'u8[512]{0}', space=vmem, size = 0x400, scoped, tag = 'output window, operand 0, single buffered']
    %11 = vsyncpa [#allocation3], 0
    %12 = vsyncpa [#allocation6], 0
    %13 = vsyncpa [#allocation4], 0
    // Predicated region
    $region2: #{tpu_custom_call.1} parent=1 // pred_check
      _
    $region3: #{tpu_custom_call.1} parent=1 // pred_check_branch
      %15 = sbr.rel (0) target = $region5
    $region4: #{tpu_custom_call.1} parent=1 // pred_region
      _
    $region5: #{tpu_custom_call.1} parent=1 // pred_fallthru
      _
    // Predicated region
    $region6: #{tpu_custom_call.1} parent=1 // pred_check
      _
    $region7: #{tpu_custom_call.1} parent=1 // pred_check_branch
      %17 = sbr.rel (0) target = $region9
    $region8: #{tpu_custom_call.1} parent=1 // pred_region
      _
    $region9: #{tpu_custom_call.1} parent=1 // pred_fallthru
      _
    // Predicated region
    $region10: #{tpu_custom_call.1} parent=1 // pred_check
      _
    $region11: #{tpu_custom_call.1} parent=1 // pred_check_branch
      %19 = sbr.rel (0) target = $region13
    $region12: #{tpu_custom_call.1} parent=1 // pred_region
      %s21 = ssub.s32 1024, 1024
      %22 = vsyncadd [#allocation3], %s21
      %s23 = sshll.u32 [#allocation2], 4
      %s24 = int_to_ptr.vmem [resolvable:$true] %s23
      %29 = dma.hbm_to_vmem [thread:$0]  %s2, 1024, %s24, [#allocation3], 64, 64, 4
    $region13: #{tpu_custom_call.1} parent=1 // pred_fallthru
      _
    // Predicated region
    $region14: #{tpu_custom_call.1} parent=1 // pred_check
      _
    $region15: #{tpu_custom_call.1} parent=1 // pred_check_branch
      %31 = sbr.rel (0) target = $region17
    $region16: #{tpu_custom_call.1} parent=1 // pred_region
      %s33 = ssub.s32 4096, 4096
      %34 = vsyncadd [#allocation6], %s33
      %s35 = sshll.u32 [#allocation5], 4
      %s36 = int_to_ptr.vmem [resolvable:$true] %s35
      %41 = dma.hbm_to_vmem [thread:$0]  %s3, 4096, %s36, [#allocation6], 128, 128, 8
    $region17: #{tpu_custom_call.1} parent=1 // pred_fallthru
      _
    // Predicated region
    $region18: #{tpu_custom_call.1} parent=1 // pred_check
      _
    $region19: #{tpu_custom_call.1} parent=1 // pred_check_branch
      %43 = sbr.rel (0) target = $region21
    $region20: #{tpu_custom_call.1} parent=1 // pred_region
      %s45 = ssub.s32 2048, 2048
      %46 = vsyncadd [#allocation6], %s45
      %s47 = sshll.u32 [#allocation7], 4
      %s48 = int_to_ptr.vmem [resolvable:$true] %s47
      %53 = dma.hbm_to_vmem [thread:$0]  %s4, 2048, %s48, [#allocation6], 64, 64, 4
    $region21: #{tpu_custom_call.1} parent=1 // pred_fallthru
      _
    // Predicated region
    $region22: #{tpu_custom_call.1} parent=1 // pred_check
      _
    $region23: #{tpu_custom_call.1} parent=1 // pred_check_branch
      %55 = sbr.rel (0) target = $region25
    $region24: #{tpu_custom_call.1} parent=1 // pred_region
      _
    $region25: #{tpu_custom_call.1} parent=1 // pred_fallthru
      _
    // Predicated region
    $region26: #{tpu_custom_call.1} parent=1 // pred_check
      _
    $region27: #{tpu_custom_call.1} parent=1 // pred_check_branch
      %57 = sbr.rel (0) target = $region29
    $region28: #{tpu_custom_call.1} parent=1 // pred_region
      %58 = dma.done [#allocation3], 1024
    $region29: #{tpu_custom_call.1} parent=1 // pred_fallthru
      _
    // Predicated region
    $region30: #{tpu_custom_call.1} parent=1 // pred_check
      _
    $region31: #{tpu_custom_call.1} parent=1 // pred_check_branch
      %60 = sbr.rel (0) target = $region33
    $region32: #{tpu_custom_call.1} parent=1 // pred_region
      %61 = dma.done [#allocation6], 4096
    $region33: #{tpu_custom_call.1} parent=1 // pred_fallthru
      _
    // Predicated region
    $region34: #{tpu_custom_call.1} parent=1 // pred_check
      _
    $region35: #{tpu_custom_call.1} parent=1 // pred_check_branch
      %63 = sbr.rel (0) target = $region37
    $region36: #{tpu_custom_call.1} parent=1 // pred_region
      %64 = dma.done [#allocation6], 2048
    $region37: #{tpu_custom_call.1} parent=1 // pred_fallthru
      _
    %v66 = vld [vmem:[%s0] sm:$0xff]
    %v67 = vld [vmem:[%s0 + $0x8] sm:$0xff]
    %v68 = vld [vmem:[%s0 + $0x10] sm:$0xff]
    %v69 = vld [vmem:[%s0 + $0x18] sm:$0xff]
    %v70 = vld [vmem:[%s0 + $0x20] sm:$0xff]
    %v71 = vld [vmem:[%s0 + $0x28] sm:$0xff]
    %v72 = vld [vmem:[%s0 + $0x30] sm:$0xff]
    %v73 = vld [vmem:[%s0 + $0x38] sm:$0xff]
    %v74 = vld [vmem:[%s0 + $0x40] sm:$0xff]
    %v75 = vld [vmem:[%s0 + $0x48] sm:$0xff]
    %v76 = vld [vmem:[%s0 + $0x50] sm:$0xff]
    %v77 = vld [vmem:[%s0 + $0x58] sm:$0xff]
    %v78 = vld [vmem:[%s0 + $0x60] sm:$0xff]
    %v79 = vld [vmem:[%s0 + $0x68] sm:$0xff]
    %v80 = vld [vmem:[%s0 + $0x70] sm:$0xff]
    %v81 = vld [vmem:[%s0 + $0x78] sm:$0xff]
    %v82 = vld [vmem:[%s1] sm:$0xff]
    %v83 = vld [vmem:[%s1 + $0x8] sm:$0xff]
    %v84 = vld [vmem:[%s1 + $0x10] sm:$0xff]
    %v85 = vld [vmem:[%s1 + $0x18] sm:$0xff]
    %v86 = vld [vmem:[%s1 + $0x20] sm:$0xff]
    %v87 = vld [vmem:[%s1 + $0x28] sm:$0xff]
    %v88 = vld [vmem:[%s1 + $0x30] sm:$0xff]
    %v89 = vld [vmem:[%s1 + $0x38] sm:$0xff]
    %v90 = vld [vmem:[%s1 + $0x40] sm:$0xff]
    %v91 = vld [vmem:[%s1 + $0x48] sm:$0xff]
    %v92 = vld [vmem:[%s1 + $0x50] sm:$0xff]
    %v93 = vld [vmem:[%s1 + $0x58] sm:$0xff]
    %v94 = vld [vmem:[%s1 + $0x60] sm:$0xff]
    %v95 = vld [vmem:[%s1 + $0x68] sm:$0xff]
    %v96 = vld [vmem:[%s1 + $0x70] sm:$0xff]
    %v97 = vld [vmem:[%s1 + $0x78] sm:$0xff]
    %v98 = vlaneseq
    %v99 = vand.u32 %v98, 127
    %100 = vset.pattern.permute.xlu0 0
    %101 = vperm.xlu0 %100, %v66
    %v102 = vpop.permute.xlu0 %101
    %103 = vset.pattern.permute.xlu0 0
    %104 = vperm.xlu0 %103, %v67
    %v105 = vpop.permute.xlu0 %104
    %106 = vset.pattern.permute.xlu0 0
    %107 = vperm.xlu0 %106, %v68
    %v108 = vpop.permute.xlu0 %107
    %109 = vset.pattern.permute.xlu0 0
    %110 = vperm.xlu0 %109, %v69
    %v111 = vpop.permute.xlu0 %110
    %112 = vset.pattern.permute.xlu0 0
    %113 = vperm.xlu0 %112, %v70
    %v114 = vpop.permute.xlu0 %113
    %115 = vset.pattern.permute.xlu0 0
    %116 = vperm.xlu0 %115, %v71
    %v117 = vpop.permute.xlu0 %116
    %118 = vset.pattern.permute.xlu0 0
    %119 = vperm.xlu0 %118, %v72
    %v120 = vpop.permute.xlu0 %119
    %121 = vset.pattern.permute.xlu0 0
    %122 = vperm.xlu0 %121, %v73
    %v123 = vpop.permute.xlu0 %122
    %124 = vset.pattern.permute.xlu0 0
    %125 = vperm.xlu0 %124, %v74
    %v126 = vpop.permute.xlu0 %125
    %127 = vset.pattern.permute.xlu0 0
    %128 = vperm.xlu0 %127, %v75
    %v129 = vpop.permute.xlu0 %128
    %130 = vset.pattern.permute.xlu0 0
    %131 = vperm.xlu0 %130, %v76
    %v132 = vpop.permute.xlu0 %131
    %133 = vset.pattern.permute.xlu0 0
    %134 = vperm.xlu0 %133, %v77
    %v135 = vpop.permute.xlu0 %134
    %136 = vset.pattern.permute.xlu0 0
    %137 = vperm.xlu0 %136, %v78
    %v138 = vpop.permute.xlu0 %137
    %139 = vset.pattern.permute.xlu0 0
    %140 = vperm.xlu0 %139, %v79
    %v141 = vpop.permute.xlu0 %140
    %142 = vset.pattern.permute.xlu0 0
    %143 = vperm.xlu0 %142, %v80
    %v144 = vpop.permute.xlu0 %143
    %145 = vset.pattern.permute.xlu0 0
    %146 = vperm.xlu0 %145, %v81
    %v147 = vpop.permute.xlu0 %146
    %vm148 = vcmp.eq.s32.totalorder %v102, %v99
    %vm149 = vcmp.eq.s32.totalorder %v105, %v99
    %vm150 = vcmp.eq.s32.totalorder %v108, %v99
    %vm151 = vcmp.eq.s32.totalorder %v111, %v99
    %vm152 = vcmp.eq.s32.totalorder %v114, %v99
    %vm153 = vcmp.eq.s32.totalorder %v117, %v99
    %vm154 = vcmp.eq.s32.totalorder %v120, %v99
    %vm155 = vcmp.eq.s32.totalorder %v123, %v99
    %vm156 = vcmp.eq.s32.totalorder %v126, %v99
    %vm157 = vcmp.eq.s32.totalorder %v129, %v99
    %vm158 = vcmp.eq.s32.totalorder %v132, %v99
    %vm159 = vcmp.eq.s32.totalorder %v135, %v99
    %vm160 = vcmp.eq.s32.totalorder %v138, %v99
    %vm161 = vcmp.eq.s32.totalorder %v141, %v99
    %vm162 = vcmp.eq.s32.totalorder %v144, %v99
    %vm163 = vcmp.eq.s32.totalorder %v147, %v99
    %165 = vset.pattern.permute.xlu0 8
    %166 = vperm.xlu0 %165, %v82
    %v167 = vpop.permute.xlu0 %166
    %170 = vset.pattern.permute.xlu0 8
    %171 = vperm.xlu0 %170, %v83
    %v172 = vpop.permute.xlu0 %171
    %175 = vset.pattern.permute.xlu0 8
    %176 = vperm.xlu0 %175, %v84
    %v177 = vpop.permute.xlu0 %176
    %180 = vset.pattern.permute.xlu0 8
    %181 = vperm.xlu0 %180, %v85
    %v182 = vpop.permute.xlu0 %181
    %185 = vset.pattern.permute.xlu0 8
    %186 = vperm.xlu0 %185, %v86
    %v187 = vpop.permute.xlu0 %186
    %190 = vset.pattern.permute.xlu0 8
    %191 = vperm.xlu0 %190, %v87
    %v192 = vpop.permute.xlu0 %191
    %195 = vset.pattern.permute.xlu0 8
    %196 = vperm.xlu0 %195, %v88
    %v197 = vpop.permute.xlu0 %196
    %200 = vset.pattern.permute.xlu0 8
    %201 = vperm.xlu0 %200, %v89
    %v202 = vpop.permute.xlu0 %201
    %205 = vset.pattern.permute.xlu0 8
    %206 = vperm.xlu0 %205, %v90
    %v207 = vpop.permute.xlu0 %206
    %210 = vset.pattern.permute.xlu0 8
    %211 = vperm.xlu0 %210, %v91
    %v212 = vpop.permute.xlu0 %211
    %215 = vset.pattern.permute.xlu0 8
    %216 = vperm.xlu0 %215, %v92
    %v217 = vpop.permute.xlu0 %216
    %220 = vset.pattern.permute.xlu0 8
    %221 = vperm.xlu0 %220, %v93
    %v222 = vpop.permute.xlu0 %221
    %225 = vset.pattern.permute.xlu0 8
    %226 = vperm.xlu0 %225, %v94
    %v227 = vpop.permute.xlu0 %226
    %230 = vset.pattern.permute.xlu0 8
    %231 = vperm.xlu0 %230, %v95
    %v232 = vpop.permute.xlu0 %231
    %235 = vset.pattern.permute.xlu0 8
    %236 = vperm.xlu0 %235, %v96
    %v237 = vpop.permute.xlu0 %236
    %240 = vset.pattern.permute.xlu0 8
    %241 = vperm.xlu0 %240, %v97
    %v242 = vpop.permute.xlu0 %241
    %v244 = vsel %vm148, %v167, 0.0
    %v245 = vsel %vm149, %v172, 0.0
    %v246 = vsel %vm150, %v177, 0.0
    %v247 = vsel %vm151, %v182, 0.0
    %v248 = vsel %vm152, %v187, 0.0
    %v249 = vsel %vm153, %v192, 0.0
    %v250 = vsel %vm154, %v197, 0.0
    %v251 = vsel %vm155, %v202, 0.0
    %v252 = vsel %vm156, %v207, 0.0
    %v253 = vsel %vm157, %v212, 0.0
    %v254 = vsel %vm158, %v217, 0.0
    %v255 = vsel %vm159, %v222, 0.0
    %v256 = vsel %vm160, %v227, 0.0
    %v257 = vsel %vm161, %v232, 0.0
    %v258 = vsel %vm162, %v237, 0.0
    %v259 = vsel %vm163, %v242, 0.0
    %v260 = vadd.f32 %v244, 0.0
    %v261 = vadd.f32 %v245, 0.0
    %v262 = vadd.f32 %v246, 0.0
    %v263 = vadd.f32 %v247, 0.0
    %v264 = vadd.f32 %v248, 0.0
    %v265 = vadd.f32 %v249, 0.0
    %v266 = vadd.f32 %v250, 0.0
    %v267 = vadd.f32 %v251, 0.0
    %v268 = vadd.f32 %v252, 0.0
    %v269 = vadd.f32 %v253, 0.0
    %v270 = vadd.f32 %v254, 0.0
    %v271 = vadd.f32 %v255, 0.0
    %v272 = vadd.f32 %v256, 0.0
    %v273 = vadd.f32 %v257, 0.0
    %v274 = vadd.f32 %v258, 0.0
    %v275 = vadd.f32 %v259, 0.0
    %276 = vset.pattern.permute.xlu0 1
    %277 = vperm.xlu0 %276, %v66
    %v278 = vpop.permute.xlu0 %277
    %279 = vset.pattern.permute.xlu0 1
    %280 = vperm.xlu0 %279, %v67
    %v281 = vpop.permute.xlu0 %280
    %282 = vset.pattern.permute.xlu0 1
    %283 = vperm.xlu0 %282, %v68
    %v284 = vpop.permute.xlu0 %283
    %285 = vset.pattern.permute.xlu0 1
    %286 = vperm.xlu0 %285, %v69
    %v287 = vpop.permute.xlu0 %286
    %288 = vset.pattern.permute.xlu0 1
    %289 = vperm.xlu0 %288, %v70
    %v290 = vpop.permute.xlu0 %289
    %291 = vset.pattern.permute.xlu0 1
    %292 = vperm.xlu0 %291, %v71
    %v293 = vpop.permute.xlu0 %292
    %294 = vset.pattern.permute.xlu0 1
    %295 = vperm.xlu0 %294, %v72
    %v296 = vpop.permute.xlu0 %295
    %297 = vset.pattern.permute.xlu0 1
    %298 = vperm.xlu0 %297, %v73
    %v299 = vpop.permute.xlu0 %298
    %300 = vset.pattern.permute.xlu0 1
    %301 = vperm.xlu0 %300, %v74
    %v302 = vpop.permute.xlu0 %301
    %303 = vset.pattern.permute.xlu0 1
    %304 = vperm.xlu0 %303, %v75
    %v305 = vpop.permute.xlu0 %304
    %306 = vset.pattern.permute.xlu0 1
    %307 = vperm.xlu0 %306, %v76
    %v308 = vpop.permute.xlu0 %307
    %309 = vset.pattern.permute.xlu0 1
    %310 = vperm.xlu0 %309, %v77
    %v311 = vpop.permute.xlu0 %310
    %312 = vset.pattern.permute.xlu0 1
    %313 = vperm.xlu0 %312, %v78
    %v314 = vpop.permute.xlu0 %313
    %315 = vset.pattern.permute.xlu0 1
    %316 = vperm.xlu0 %315, %v79
    %v317 = vpop.permute.xlu0 %316
    %318 = vset.pattern.permute.xlu0 1
    %319 = vperm.xlu0 %318, %v80
    %v320 = vpop.permute.xlu0 %319
    %321 = vset.pattern.permute.xlu0 1
    %322 = vperm.xlu0 %321, %v81
    %v323 = vpop.permute.xlu0 %322
    %vm324 = vcmp.eq.s32.totalorder %v278, %v99
    %vm325 = vcmp.eq.s32.totalorder %v281, %v99
    %vm326 = vcmp.eq.s32.totalorder %v284, %v99
    %vm327 = vcmp.eq.s32.totalorder %v287, %v99
    %vm328 = vcmp.eq.s32.totalorder %v290, %v99
    %vm329 = vcmp.eq.s32.totalorder %v293, %v99
    %vm330 = vcmp.eq.s32.totalorder %v296, %v99
    %vm331 = vcmp.eq.s32.totalorder %v299, %v99
    %vm332 = vcmp.eq.s32.totalorder %v302, %v99
    %vm333 = vcmp.eq.s32.totalorder %v305, %v99
    %vm334 = vcmp.eq.s32.totalorder %v308, %v99
    %vm335 = vcmp.eq.s32.totalorder %v311, %v99
    %vm336 = vcmp.eq.s32.totalorder %v314, %v99
    %vm337 = vcmp.eq.s32.totalorder %v317, %v99
    %vm338 = vcmp.eq.s32.totalorder %v320, %v99
    %vm339 = vcmp.eq.s32.totalorder %v323, %v99
    %340 = vset.pattern.permute.xlu0 9
    %341 = vperm.xlu0 %340, %v82
    %v342 = vpop.permute.xlu0 %341
    %344 = vset.pattern.permute.xlu0 9
    %345 = vperm.xlu0 %344, %v83
    %v346 = vpop.permute.xlu0 %345
    %348 = vset.pattern.permute.xlu0 9
    %349 = vperm.xlu0 %348, %v84
    %v350 = vpop.permute.xlu0 %349
    %352 = vset.pattern.permute.xlu0 9
    %353 = vperm.xlu0 %352, %v85
    %v354 = vpop.permute.xlu0 %353
    %356 = vset.pattern.permute.xlu0 9
    %357 = vperm.xlu0 %356, %v86
    %v358 = vpop.permute.xlu0 %357
    %360 = vset.pattern.permute.xlu0 9
    %361 = vperm.xlu0 %360, %v87
    %v362 = vpop.permute.xlu0 %361
    %364 = vset.pattern.permute.xlu0 9
    %365 = vperm.xlu0 %364, %v88
    %v366 = vpop.permute.xlu0 %365
    %368 = vset.pattern.permute.xlu0 9
    %369 = vperm.xlu0 %368, %v89
    %v370 = vpop.permute.xlu0 %369
    %372 = vset.pattern.permute.xlu0 9
    %373 = vperm.xlu0 %372, %v90
    %v374 = vpop.permute.xlu0 %373
    %376 = vset.pattern.permute.xlu0 9
    %377 = vperm.xlu0 %376, %v91
    %v378 = vpop.permute.xlu0 %377
    %380 = vset.pattern.permute.xlu0 9
    %381 = vperm.xlu0 %380, %v92
    %v382 = vpop.permute.xlu0 %381
    %384 = vset.pattern.permute.xlu0 9
    %385 = vperm.xlu0 %384, %v93
    %v386 = vpop.permute.xlu0 %385
    %388 = vset.pattern.permute.xlu0 9
    %389 = vperm.xlu0 %388, %v94
    %v390 = vpop.permute.xlu0 %389
    %392 = vset.pattern.permute.xlu0 9
    %393 = vperm.xlu0 %392, %v95
    %v394 = vpop.permute.xlu0 %393
    %396 = vset.pattern.permute.xlu0 9
    %397 = vperm.xlu0 %396, %v96
    %v398 = vpop.permute.xlu0 %397
    %400 = vset.pattern.permute.xlu0 9
    %401 = vperm.xlu0 %400, %v97
    %v402 = vpop.permute.xlu0 %401
    %v404 = vsel %vm324, %v342, 0.0
    %v405 = vsel %vm325, %v346, 0.0
    %v406 = vsel %vm326, %v350, 0.0
    %v407 = vsel %vm327, %v354, 0.0
    %v408 = vsel %vm328, %v358, 0.0
    %v409 = vsel %vm329, %v362, 0.0
    %v410 = vsel %vm330, %v366, 0.0
    %v411 = vsel %vm331, %v370, 0.0
    %v412 = vsel %vm332, %v374, 0.0
    %v413 = vsel %vm333, %v378, 0.0
    %v414 = vsel %vm334, %v382, 0.0
    %v415 = vsel %vm335, %v386, 0.0
    %v416 = vsel %vm336, %v390, 0.0
    %v417 = vsel %vm337, %v394, 0.0
    %v418 = vsel %vm338, %v398, 0.0
    %v419 = vsel %vm339, %v402, 0.0
    %v420 = vadd.f32 %v260, %v404
    %v421 = vadd.f32 %v261, %v405
    %v422 = vadd.f32 %v262, %v406
    %v423 = vadd.f32 %v263, %v407
    %v424 = vadd.f32 %v264, %v408
    %v425 = vadd.f32 %v265, %v409
    %v426 = vadd.f32 %v266, %v410
    %v427 = vadd.f32 %v267, %v411
    %v428 = vadd.f32 %v268, %v412
    %v429 = vadd.f32 %v269, %v413
    %v430 = vadd.f32 %v270, %v414
    %v431 = vadd.f32 %v271, %v415
    %v432 = vadd.f32 %v272, %v416
    %v433 = vadd.f32 %v273, %v417
    %v434 = vadd.f32 %v274, %v418
    %v435 = vadd.f32 %v275, %v419
    %436 = vset.pattern.permute.xlu0 2
    %437 = vperm.xlu0 %436, %v66
    %v438 = vpop.permute.xlu0 %437
    %439 = vset.pattern.permute.xlu0 2
    %440 = vperm.xlu0 %439, %v67
    %v441 = vpop.permute.xlu0 %440
    %442 = vset.pattern.permute.xlu0 2
    %443 = vperm.xlu0 %442, %v68
    %v444 = vpop.permute.xlu0 %443
    %445 = vset.pattern.permute.xlu0 2
    %446 = vperm.xlu0 %445, %v69
    %v447 = vpop.permute.xlu0 %446
    %448 = vset.pattern.permute.xlu0 2
    %449 = vperm.xlu0 %448, %v70
    %v450 = vpop.permute.xlu0 %449
    %451 = vset.pattern.permute.xlu0 2
    %452 = vperm.xlu0 %451, %v71
    %v453 = vpop.permute.xlu0 %452
    %454 = vset.pattern.permute.xlu0 2
    %455 = vperm.xlu0 %454, %v72
    %v456 = vpop.permute.xlu0 %455
    %457 = vset.pattern.permute.xlu0 2
    %458 = vperm.xlu0 %457, %v73
    %v459 = vpop.permute.xlu0 %458
    %460 = vset.pattern.permute.xlu0 2
    %461 = vperm.xlu0 %460, %v74
    %v462 = vpop.permute.xlu0 %461
    %463 = vset.pattern.permute.xlu0 2
    %464 = vperm.xlu0 %463, %v75
    %v465 = vpop.permute.xlu0 %464
    %466 = vset.pattern.permute.xlu0 2
    %467 = vperm.xlu0 %466, %v76
    %v468 = vpop.permute.xlu0 %467
    %469 = vset.pattern.permute.xlu0 2
    %470 = vperm.xlu0 %469, %v77
    %v471 = vpop.permute.xlu0 %470
    %472 = vset.pattern.permute.xlu0 2
    %473 = vperm.xlu0 %472, %v78
    %v474 = vpop.permute.xlu0 %473
    %475 = vset.pattern.permute.xlu0 2
    %476 = vperm.xlu0 %475, %v79
    %v477 = vpop.permute.xlu0 %476
    %478 = vset.pattern.permute.xlu0 2
    %479 = vperm.xlu0 %478, %v80
    %v480 = vpop.permute.xlu0 %479
    %481 = vset.pattern.permute.xlu0 2
    %482 = vperm.xlu0 %481, %v81
    %v483 = vpop.permute.xlu0 %482
    %vm484 = vcmp.eq.s32.totalorder %v438, %v99
    %vm485 = vcmp.eq.s32.totalorder %v441, %v99
    %vm486 = vcmp.eq.s32.totalorder %v444, %v99
    %vm487 = vcmp.eq.s32.totalorder %v447, %v99
    %vm488 = vcmp.eq.s32.totalorder %v450, %v99
    %vm489 = vcmp.eq.s32.totalorder %v453, %v99
    %vm490 = vcmp.eq.s32.totalorder %v456, %v99
    %vm491 = vcmp.eq.s32.totalorder %v459, %v99
    %vm492 = vcmp.eq.s32.totalorder %v462, %v99
    %vm493 = vcmp.eq.s32.totalorder %v465, %v99
    %vm494 = vcmp.eq.s32.totalorder %v468, %v99
    %vm495 = vcmp.eq.s32.totalorder %v471, %v99
    %vm496 = vcmp.eq.s32.totalorder %v474, %v99
    %vm497 = vcmp.eq.s32.totalorder %v477, %v99
    %vm498 = vcmp.eq.s32.totalorder %v480, %v99
    %vm499 = vcmp.eq.s32.totalorder %v483, %v99
    %500 = vset.pattern.permute.xlu0 10
    %501 = vperm.xlu0 %500, %v82
    %v502 = vpop.permute.xlu0 %501
    %504 = vset.pattern.permute.xlu0 10
    %505 = vperm.xlu0 %504, %v83
    %v506 = vpop.permute.xlu0 %505
    %508 = vset.pattern.permute.xlu0 10
    %509 = vperm.xlu0 %508, %v84
    %v510 = vpop.permute.xlu0 %509
    %512 = vset.pattern.permute.xlu0 10
    %513 = vperm.xlu0 %512, %v85
    %v514 = vpop.permute.xlu0 %513
    %516 = vset.pattern.permute.xlu0 10
    %517 = vperm.xlu0 %516, %v86
    %v518 = vpop.permute.xlu0 %517
    %520 = vset.pattern.permute.xlu0 10
    %521 = vperm.xlu0 %520, %v87
    %v522 = vpop.permute.xlu0 %521
    %524 = vset.pattern.permute.xlu0 10
    %525 = vperm.xlu0 %524, %v88
    %v526 = vpop.permute.xlu0 %525
    %528 = vset.pattern.permute.xlu0 10
    %529 = vperm.xlu0 %528, %v89
    %v530 = vpop.permute.xlu0 %529
    %532 = vset.pattern.permute.xlu0 10
    %533 = vperm.xlu0 %532, %v90
    %v534 = vpop.permute.xlu0 %533
    %536 = vset.pattern.permute.xlu0 10
    %537 = vperm.xlu0 %536, %v91
    %v538 = vpop.permute.xlu0 %537
    %540 = vset.pattern.permute.xlu0 10
    %541 = vperm.xlu0 %540, %v92
    %v542 = vpop.permute.xlu0 %541
    %544 = vset.pattern.permute.xlu0 10
    %545 = vperm.xlu0 %544, %v93
    %v546 = vpop.permute.xlu0 %545
    %548 = vset.pattern.permute.xlu0 10
    %549 = vperm.xlu0 %548, %v94
    %v550 = vpop.permute.xlu0 %549
    %552 = vset.pattern.permute.xlu0 10
    %553 = vperm.xlu0 %552, %v95
    %v554 = vpop.permute.xlu0 %553
    %556 = vset.pattern.permute.xlu0 10
    %557 = vperm.xlu0 %556, %v96
    %v558 = vpop.permute.xlu0 %557
    %560 = vset.pattern.permute.xlu0 10
    %561 = vperm.xlu0 %560, %v97
    %v562 = vpop.permute.xlu0 %561
    %v564 = vsel %vm484, %v502, 0.0
    %v565 = vsel %vm485, %v506, 0.0
    %v566 = vsel %vm486, %v510, 0.0
    %v567 = vsel %vm487, %v514, 0.0
    %v568 = vsel %vm488, %v518, 0.0
    %v569 = vsel %vm489, %v522, 0.0
    %v570 = vsel %vm490, %v526, 0.0
    %v571 = vsel %vm491, %v530, 0.0
    %v572 = vsel %vm492, %v534, 0.0
    %v573 = vsel %vm493, %v538, 0.0
    %v574 = vsel %vm494, %v542, 0.0
    %v575 = vsel %vm495, %v546, 0.0
    %v576 = vsel %vm496, %v550, 0.0
    %v577 = vsel %vm497, %v554, 0.0
    %v578 = vsel %vm498, %v558, 0.0
    %v579 = vsel %vm499, %v562, 0.0
    %v580 = vadd.f32 %v420, %v564
    %v581 = vadd.f32 %v421, %v565
    %v582 = vadd.f32 %v422, %v566
    %v583 = vadd.f32 %v423, %v567
    %v584 = vadd.f32 %v424, %v568
    %v585 = vadd.f32 %v425, %v569
    %v586 = vadd.f32 %v426, %v570
    %v587 = vadd.f32 %v427, %v571
    %v588 = vadd.f32 %v428, %v572
    %v589 = vadd.f32 %v429, %v573
    %v590 = vadd.f32 %v430, %v574
    %v591 = vadd.f32 %v431, %v575
    %v592 = vadd.f32 %v432, %v576
    %v593 = vadd.f32 %v433, %v577
    %v594 = vadd.f32 %v434, %v578
    %v595 = vadd.f32 %v435, %v579
    %596 = vset.pattern.permute.xlu0 3
    %597 = vperm.xlu0 %596, %v66
    %v598 = vpop.permute.xlu0 %597
    %599 = vset.pattern.permute.xlu0 3
    %600 = vperm.xlu0 %599, %v67
    %v601 = vpop.permute.xlu0 %600
    %602 = vset.pattern.permute.xlu0 3
    %603 = vperm.xlu0 %602, %v68
    %v604 = vpop.permute.xlu0 %603
    %605 = vset.pattern.permute.xlu0 3
    %606 = vperm.xlu0 %605, %v69
    %v607 = vpop.permute.xlu0 %606
    %608 = vset.pattern.permute.xlu0 3
    %609 = vperm.xlu0 %608, %v70
    %v610 = vpop.permute.xlu0 %609
    %611 = vset.pattern.permute.xlu0 3
    %612 = vperm.xlu0 %611, %v71
    %v613 = vpop.permute.xlu0 %612
    %614 = vset.pattern.permute.xlu0 3
    %615 = vperm.xlu0 %614, %v72
    %v616 = vpop.permute.xlu0 %615
    %617 = vset.pattern.permute.xlu0 3
    %618 = vperm.xlu0 %617, %v73
    %v619 = vpop.permute.xlu0 %618
    %620 = vset.pattern.permute.xlu0 3
    %621 = vperm.xlu0 %620, %v74
    %v622 = vpop.permute.xlu0 %621
    %623 = vset.pattern.permute.xlu0 3
    %624 = vperm.xlu0 %623, %v75
    %v625 = vpop.permute.xlu0 %624
    %626 = vset.pattern.permute.xlu0 3
    %627 = vperm.xlu0 %626, %v76
    %v628 = vpop.permute.xlu0 %627
    %629 = vset.pattern.permute.xlu0 3
    %630 = vperm.xlu0 %629, %v77
    %v631 = vpop.permute.xlu0 %630
    %632 = vset.pattern.permute.xlu0 3
    %633 = vperm.xlu0 %632, %v78
    %v634 = vpop.permute.xlu0 %633
    %635 = vset.pattern.permute.xlu0 3
    %636 = vperm.xlu0 %635, %v79
    %v637 = vpop.permute.xlu0 %636
    %638 = vset.pattern.permute.xlu0 3
    %639 = vperm.xlu0 %638, %v80
    %v640 = vpop.permute.xlu0 %639
    %641 = vset.pattern.permute.xlu0 3
    %642 = vperm.xlu0 %641, %v81
    %v643 = vpop.permute.xlu0 %642
    %vm644 = vcmp.eq.s32.totalorder %v598, %v99
    %vm645 = vcmp.eq.s32.totalorder %v601, %v99
    %vm646 = vcmp.eq.s32.totalorder %v604, %v99
    %vm647 = vcmp.eq.s32.totalorder %v607, %v99
    %vm648 = vcmp.eq.s32.totalorder %v610, %v99
    %vm649 = vcmp.eq.s32.totalorder %v613, %v99
    %vm650 = vcmp.eq.s32.totalorder %v616, %v99
    %vm651 = vcmp.eq.s32.totalorder %v619, %v99
    %vm652 = vcmp.eq.s32.totalorder %v622, %v99
    %vm653 = vcmp.eq.s32.totalorder %v625, %v99
    %vm654 = vcmp.eq.s32.totalorder %v628, %v99
    %vm655 = vcmp.eq.s32.totalorder %v631, %v99
    %vm656 = vcmp.eq.s32.totalorder %v634, %v99
    %vm657 = vcmp.eq.s32.totalorder %v637, %v99
    %vm658 = vcmp.eq.s32.totalorder %v640, %v99
    %vm659 = vcmp.eq.s32.totalorder %v643, %v99
    %660 = vset.pattern.permute.xlu0 11
    %661 = vperm.xlu0 %660, %v82
    %v662 = vpop.permute.xlu0 %661
    %664 = vset.pattern.permute.xlu0 11
    %665 = vperm.xlu0 %664, %v83
    %v666 = vpop.permute.xlu0 %665
    %668 = vset.pattern.permute.xlu0 11
    %669 = vperm.xlu0 %668, %v84
    %v670 = vpop.permute.xlu0 %669
    %672 = vset.pattern.permute.xlu0 11
    %673 = vperm.xlu0 %672, %v85
    %v674 = vpop.permute.xlu0 %673
    %676 = vset.pattern.permute.xlu0 11
    %677 = vperm.xlu0 %676, %v86
    %v678 = vpop.permute.xlu0 %677
    %680 = vset.pattern.permute.xlu0 11
    %681 = vperm.xlu0 %680, %v87
    %v682 = vpop.permute.xlu0 %681
    %684 = vset.pattern.permute.xlu0 11
    %685 = vperm.xlu0 %684, %v88
    %v686 = vpop.permute.xlu0 %685
    %688 = vset.pattern.permute.xlu0 11
    %689 = vperm.xlu0 %688, %v89
    %v690 = vpop.permute.xlu0 %689
    %692 = vset.pattern.permute.xlu0 11
    %693 = vperm.xlu0 %692, %v90
    %v694 = vpop.permute.xlu0 %693
    %696 = vset.pattern.permute.xlu0 11
    %697 = vperm.xlu0 %696, %v91
    %v698 = vpop.permute.xlu0 %697
    %700 = vset.pattern.permute.xlu0 11
    %701 = vperm.xlu0 %700, %v92
    %v702 = vpop.permute.xlu0 %701
    %704 = vset.pattern.permute.xlu0 11
    %705 = vperm.xlu0 %704, %v93
    %v706 = vpop.permute.xlu0 %705
    %708 = vset.pattern.permute.xlu0 11
    %709 = vperm.xlu0 %708, %v94
    %v710 = vpop.permute.xlu0 %709
    %712 = vset.pattern.permute.xlu0 11
    %713 = vperm.xlu0 %712, %v95
    %v714 = vpop.permute.xlu0 %713
    %716 = vset.pattern.permute.xlu0 11
    %717 = vperm.xlu0 %716, %v96
    %v718 = vpop.permute.xlu0 %717
    %720 = vset.pattern.permute.xlu0 11
    %721 = vperm.xlu0 %720, %v97
    %v722 = vpop.permute.xlu0 %721
    %v724 = vsel %vm644, %v662, 0.0
    %v725 = vsel %vm645, %v666, 0.0
    %v726 = vsel %vm646, %v670, 0.0
    %v727 = vsel %vm647, %v674, 0.0
    %v728 = vsel %vm648, %v678, 0.0
    %v729 = vsel %vm649, %v682, 0.0
    %v730 = vsel %vm650, %v686, 0.0
    %v731 = vsel %vm651, %v690, 0.0
    %v732 = vsel %vm652, %v694, 0.0
    %v733 = vsel %vm653, %v698, 0.0
    %v734 = vsel %vm654, %v702, 0.0
    %v735 = vsel %vm655, %v706, 0.0
    %v736 = vsel %vm656, %v710, 0.0
    %v737 = vsel %vm657, %v714, 0.0
    %v738 = vsel %vm658, %v718, 0.0
    %v739 = vsel %vm659, %v722, 0.0
    %v740 = vadd.f32 %v580, %v724
    %v741 = vadd.f32 %v581, %v725
    %v742 = vadd.f32 %v582, %v726
    %v743 = vadd.f32 %v583, %v727
    %v744 = vadd.f32 %v584, %v728
    %v745 = vadd.f32 %v585, %v729
    %v746 = vadd.f32 %v586, %v730
    %v747 = vadd.f32 %v587, %v731
    %v748 = vadd.f32 %v588, %v732
    %v749 = vadd.f32 %v589, %v733
    %v750 = vadd.f32 %v590, %v734
    %v751 = vadd.f32 %v591, %v735
    %v752 = vadd.f32 %v592, %v736
    %v753 = vadd.f32 %v593, %v737
    %v754 = vadd.f32 %v594, %v738
    %v755 = vadd.f32 %v595, %v739
    %756 = vset.pattern.permute.xlu0 4
    %757 = vperm.xlu0 %756, %v66
    %v758 = vpop.permute.xlu0 %757
    %759 = vset.pattern.permute.xlu0 4
    %760 = vperm.xlu0 %759, %v67
    %v761 = vpop.permute.xlu0 %760
    %762 = vset.pattern.permute.xlu0 4
    %763 = vperm.xlu0 %762, %v68
    %v764 = vpop.permute.xlu0 %763
    %765 = vset.pattern.permute.xlu0 4
    %766 = vperm.xlu0 %765, %v69
    %v767 = vpop.permute.xlu0 %766
    %768 = vset.pattern.permute.xlu0 4
    %769 = vperm.xlu0 %768, %v70
    %v770 = vpop.permute.xlu0 %769
    %771 = vset.pattern.permute.xlu0 4
    %772 = vperm.xlu0 %771, %v71
    %v773 = vpop.permute.xlu0 %772
    %774 = vset.pattern.permute.xlu0 4
    %775 = vperm.xlu0 %774, %v72
    %v776 = vpop.permute.xlu0 %775
    %777 = vset.pattern.permute.xlu0 4
    %778 = vperm.xlu0 %777, %v73
    %v779 = vpop.permute.xlu0 %778
    %780 = vset.pattern.permute.xlu0 4
    %781 = vperm.xlu0 %780, %v74
    %v782 = vpop.permute.xlu0 %781
    %783 = vset.pattern.permute.xlu0 4
    %784 = vperm.xlu0 %783, %v75
    %v785 = vpop.permute.xlu0 %784
    %786 = vset.pattern.permute.xlu0 4
    %787 = vperm.xlu0 %786, %v76
    %v788 = vpop.permute.xlu0 %787
    %789 = vset.pattern.permute.xlu0 4
    %790 = vperm.xlu0 %789, %v77
    %v791 = vpop.permute.xlu0 %790
    %792 = vset.pattern.permute.xlu0 4
    %793 = vperm.xlu0 %792, %v78
    %v794 = vpop.permute.xlu0 %793
    %795 = vset.pattern.permute.xlu0 4
    %796 = vperm.xlu0 %795, %v79
    %v797 = vpop.permute.xlu0 %796
    %798 = vset.pattern.permute.xlu0 4
    %799 = vperm.xlu0 %798, %v80
    %v800 = vpop.permute.xlu0 %799
    %801 = vset.pattern.permute.xlu0 4
    %802 = vperm.xlu0 %801, %v81
    %v803 = vpop.permute.xlu0 %802
    %vm804 = vcmp.eq.s32.totalorder %v758, %v99
    %vm805 = vcmp.eq.s32.totalorder %v761, %v99
    %vm806 = vcmp.eq.s32.totalorder %v764, %v99
    %vm807 = vcmp.eq.s32.totalorder %v767, %v99
    %vm808 = vcmp.eq.s32.totalorder %v770, %v99
    %vm809 = vcmp.eq.s32.totalorder %v773, %v99
    %vm810 = vcmp.eq.s32.totalorder %v776, %v99
    %vm811 = vcmp.eq.s32.totalorder %v779, %v99
    %vm812 = vcmp.eq.s32.totalorder %v782, %v99
    %vm813 = vcmp.eq.s32.totalorder %v785, %v99
    %vm814 = vcmp.eq.s32.totalorder %v788, %v99
    %vm815 = vcmp.eq.s32.totalorder %v791, %v99
    %vm816 = vcmp.eq.s32.totalorder %v794, %v99
    %vm817 = vcmp.eq.s32.totalorder %v797, %v99
    %vm818 = vcmp.eq.s32.totalorder %v800, %v99
    %vm819 = vcmp.eq.s32.totalorder %v803, %v99
    %820 = vset.pattern.permute.xlu0 12
    %821 = vperm.xlu0 %820, %v82
    %v822 = vpop.permute.xlu0 %821
    %824 = vset.pattern.permute.xlu0 12
    %825 = vperm.xlu0 %824, %v83
    %v826 = vpop.permute.xlu0 %825
    %828 = vset.pattern.permute.xlu0 12
    %829 = vperm.xlu0 %828, %v84
    %v830 = vpop.permute.xlu0 %829
    %832 = vset.pattern.permute.xlu0 12
    %833 = vperm.xlu0 %832, %v85
    %v834 = vpop.permute.xlu0 %833
    %836 = vset.pattern.permute.xlu0 12
    %837 = vperm.xlu0 %836, %v86
    %v838 = vpop.permute.xlu0 %837
    %840 = vset.pattern.permute.xlu0 12
    %841 = vperm.xlu0 %840, %v87
    %v842 = vpop.permute.xlu0 %841
    %844 = vset.pattern.permute.xlu0 12
    %845 = vperm.xlu0 %844, %v88
    %v846 = vpop.permute.xlu0 %845
    %848 = vset.pattern.permute.xlu0 12
    %849 = vperm.xlu0 %848, %v89
    %v850 = vpop.permute.xlu0 %849
    %852 = vset.pattern.permute.xlu0 12
    %853 = vperm.xlu0 %852, %v90
    %v854 = vpop.permute.xlu0 %853
    %856 = vset.pattern.permute.xlu0 12
    %857 = vperm.xlu0 %856, %v91
    %v858 = vpop.permute.xlu0 %857
    %860 = vset.pattern.permute.xlu0 12
    %861 = vperm.xlu0 %860, %v92
    %v862 = vpop.permute.xlu0 %861
    %864 = vset.pattern.permute.xlu0 12
    %865 = vperm.xlu0 %864, %v93
    %v866 = vpop.permute.xlu0 %865
    %868 = vset.pattern.permute.xlu0 12
    %869 = vperm.xlu0 %868, %v94
    %v870 = vpop.permute.xlu0 %869
    %872 = vset.pattern.permute.xlu0 12
    %873 = vperm.xlu0 %872, %v95
    %v874 = vpop.permute.xlu0 %873
    %876 = vset.pattern.permute.xlu0 12
    %877 = vperm.xlu0 %876, %v96
    %v878 = vpop.permute.xlu0 %877
    %880 = vset.pattern.permute.xlu0 12
    %881 = vperm.xlu0 %880, %v97
    %v882 = vpop.permute.xlu0 %881
    %v884 = vsel %vm804, %v822, 0.0
    %v885 = vsel %vm805, %v826, 0.0
    %v886 = vsel %vm806, %v830, 0.0
    %v887 = vsel %vm807, %v834, 0.0
    %v888 = vsel %vm808, %v838, 0.0
    %v889 = vsel %vm809, %v842, 0.0
    %v890 = vsel %vm810, %v846, 0.0
    %v891 = vsel %vm811, %v850, 0.0
    %v892 = vsel %vm812, %v854, 0.0
    %v893 = vsel %vm813, %v858, 0.0
    %v894 = vsel %vm814, %v862, 0.0
    %v895 = vsel %vm815, %v866, 0.0
    %v896 = vsel %vm816, %v870, 0.0
    %v897 = vsel %vm817, %v874, 0.0
    %v898 = vsel %vm818, %v878, 0.0
    %v899 = vsel %vm819, %v882, 0.0
    %v900 = vadd.f32 %v740, %v884
    %v901 = vadd.f32 %v741, %v885
    %v902 = vadd.f32 %v742, %v886
    %v903 = vadd.f32 %v743, %v887
    %v904 = vadd.f32 %v744, %v888
    %v905 = vadd.f32 %v745, %v889
    %v906 = vadd.f32 %v746, %v890
    %v907 = vadd.f32 %v747, %v891
    %v908 = vadd.f32 %v748, %v892
    %v909 = vadd.f32 %v749, %v893
    %v910 = vadd.f32 %v750, %v894
    %v911 = vadd.f32 %v751, %v895
    %v912 = vadd.f32 %v752, %v896
    %v913 = vadd.f32 %v753, %v897
    %v914 = vadd.f32 %v754, %v898
    %v915 = vadd.f32 %v755, %v899
    %916 = vset.pattern.permute.xlu0 5
    %917 = vperm.xlu0 %916, %v66
    %v918 = vpop.permute.xlu0 %917
    %919 = vset.pattern.permute.xlu0 5
    %920 = vperm.xlu0 %919, %v67
    %v921 = vpop.permute.xlu0 %920
    %922 = vset.pattern.permute.xlu0 5
    %923 = vperm.xlu0 %922, %v68
    %v924 = vpop.permute.xlu0 %923
    %925 = vset.pattern.permute.xlu0 5
    %926 = vperm.xlu0 %925, %v69
    %v927 = vpop.permute.xlu0 %926
    %928 = vset.pattern.permute.xlu0 5
    %929 = vperm.xlu0 %928, %v70
    %v930 = vpop.permute.xlu0 %929
    %931 = vset.pattern.permute.xlu0 5
    %932 = vperm.xlu0 %931, %v71
    %v933 = vpop.permute.xlu0 %932
    %934 = vset.pattern.permute.xlu0 5
    %935 = vperm.xlu0 %934, %v72
    %v936 = vpop.permute.xlu0 %935
    %937 = vset.pattern.permute.xlu0 5
    %938 = vperm.xlu0 %937, %v73
    %v939 = vpop.permute.xlu0 %938
    %940 = vset.pattern.permute.xlu0 5
    %941 = vperm.xlu0 %940, %v74
    %v942 = vpop.permute.xlu0 %941
    %943 = vset.pattern.permute.xlu0 5
    %944 = vperm.xlu0 %943, %v75
    %v945 = vpop.permute.xlu0 %944
    %946 = vset.pattern.permute.xlu0 5
    %947 = vperm.xlu0 %946, %v76
    %v948 = vpop.permute.xlu0 %947
    %949 = vset.pattern.permute.xlu0 5
    %950 = vperm.xlu0 %949, %v77
    %v951 = vpop.permute.xlu0 %950
    %952 = vset.pattern.permute.xlu0 5
    %953 = vperm.xlu0 %952, %v78
    %v954 = vpop.permute.xlu0 %953
    %955 = vset.pattern.permute.xlu0 5
    %956 = vperm.xlu0 %955, %v79
    %v957 = vpop.permute.xlu0 %956
    %958 = vset.pattern.permute.xlu0 5
    %959 = vperm.xlu0 %958, %v80
    %v960 = vpop.permute.xlu0 %959
    %961 = vset.pattern.permute.xlu0 5
    %962 = vperm.xlu0 %961, %v81
    %v963 = vpop.permute.xlu0 %962
    %vm964 = vcmp.eq.s32.totalorder %v918, %v99
    %vm965 = vcmp.eq.s32.totalorder %v921, %v99
    %vm966 = vcmp.eq.s32.totalorder %v924, %v99
    %vm967 = vcmp.eq.s32.totalorder %v927, %v99
    %vm968 = vcmp.eq.s32.totalorder %v930, %v99
    %vm969 = vcmp.eq.s32.totalorder %v933, %v99
    %vm970 = vcmp.eq.s32.totalorder %v936, %v99
    %vm971 = vcmp.eq.s32.totalorder %v939, %v99
    %vm972 = vcmp.eq.s32.totalorder %v942, %v99
    %vm973 = vcmp.eq.s32.totalorder %v945, %v99
    %vm974 = vcmp.eq.s32.totalorder %v948, %v99
    %vm975 = vcmp.eq.s32.totalorder %v951, %v99
    %vm976 = vcmp.eq.s32.totalorder %v954, %v99
    %vm977 = vcmp.eq.s32.totalorder %v957, %v99
    %vm978 = vcmp.eq.s32.totalorder %v960, %v99
    %vm979 = vcmp.eq.s32.totalorder %v963, %v99
    %980 = vset.pattern.permute.xlu0 13
    %981 = vperm.xlu0 %980, %v82
    %v982 = vpop.permute.xlu0 %981
    %984 = vset.pattern.permute.xlu0 13
    %985 = vperm.xlu0 %984, %v83
    %v986 = vpop.permute.xlu0 %985
    %988 = vset.pattern.permute.xlu0 13
    %989 = vperm.xlu0 %988, %v84
    %v990 = vpop.permute.xlu0 %989
    %992 = vset.pattern.permute.xlu0 13
    %993 = vperm.xlu0 %992, %v85
    %v994 = vpop.permute.xlu0 %993
    %996 = vset.pattern.permute.xlu0 13
    %997 = vperm.xlu0 %996, %v86
    %v998 = vpop.permute.xlu0 %997
    %1000 = vset.pattern.permute.xlu0 13
    %1001 = vperm.xlu0 %1000, %v87
    %v1002 = vpop.permute.xlu0 %1001
    %1004 = vset.pattern.permute.xlu0 13
    %1005 = vperm.xlu0 %1004, %v88
    %v1006 = vpop.permute.xlu0 %1005
    %1008 = vset.pattern.permute.xlu0 13
    %1009 = vperm.xlu0 %1008, %v89
    %v1010 = vpop.permute.xlu0 %1009
    %1012 = vset.pattern.permute.xlu0 13
    %1013 = vperm.xlu0 %1012, %v90
    %v1014 = vpop.permute.xlu0 %1013
    %1016 = vset.pattern.permute.xlu0 13
    %1017 = vperm.xlu0 %1016, %v91
    %v1018 = vpop.permute.xlu0 %1017
    %1020 = vset.pattern.permute.xlu0 13
    %1021 = vperm.xlu0 %1020, %v92
    %v1022 = vpop.permute.xlu0 %1021
    %1024 = vset.pattern.permute.xlu0 13
    %1025 = vperm.xlu0 %1024, %v93
    %v1026 = vpop.permute.xlu0 %1025
    %1028 = vset.pattern.permute.xlu0 13
    %1029 = vperm.xlu0 %1028, %v94
    %v1030 = vpop.permute.xlu0 %1029
    %1032 = vset.pattern.permute.xlu0 13
    %1033 = vperm.xlu0 %1032, %v95
    %v1034 = vpop.permute.xlu0 %1033
    %1036 = vset.pattern.permute.xlu0 13
    %1037 = vperm.xlu0 %1036, %v96
    %v1038 = vpop.permute.xlu0 %1037
    %1040 = vset.pattern.permute.xlu0 13
    %1041 = vperm.xlu0 %1040, %v97
    %v1042 = vpop.permute.xlu0 %1041
    %v1044 = vsel %vm964, %v982, 0.0
    %v1045 = vsel %vm965, %v986, 0.0
    %v1046 = vsel %vm966, %v990, 0.0
    %v1047 = vsel %vm967, %v994, 0.0
    %v1048 = vsel %vm968, %v998, 0.0
    %v1049 = vsel %vm969, %v1002, 0.0
    %v1050 = vsel %vm970, %v1006, 0.0
    %v1051 = vsel %vm971, %v1010, 0.0
    %v1052 = vsel %vm972, %v1014, 0.0
    %v1053 = vsel %vm973, %v1018, 0.0
    %v1054 = vsel %vm974, %v1022, 0.0
    %v1055 = vsel %vm975, %v1026, 0.0
    %v1056 = vsel %vm976, %v1030, 0.0
    %v1057 = vsel %vm977, %v1034, 0.0
    %v1058 = vsel %vm978, %v1038, 0.0
    %v1059 = vsel %vm979, %v1042, 0.0
    %v1060 = vadd.f32 %v900, %v1044
    %v1061 = vadd.f32 %v901, %v1045
    %v1062 = vadd.f32 %v902, %v1046
    %v1063 = vadd.f32 %v903, %v1047
    %v1064 = vadd.f32 %v904, %v1048
    %v1065 = vadd.f32 %v905, %v1049
    %v1066 = vadd.f32 %v906, %v1050
    %v1067 = vadd.f32 %v907, %v1051
    %v1068 = vadd.f32 %v908, %v1052
    %v1069 = vadd.f32 %v909, %v1053
    %v1070 = vadd.f32 %v910, %v1054
    %v1071 = vadd.f32 %v911, %v1055
    %v1072 = vadd.f32 %v912, %v1056
    %v1073 = vadd.f32 %v913, %v1057
    %v1074 = vadd.f32 %v914, %v1058
    %v1075 = vadd.f32 %v915, %v1059
    %1076 = vset.pattern.permute.xlu0 6
    %1077 = vperm.xlu0 %1076, %v66
    %v1078 = vpop.permute.xlu0 %1077
    %1079 = vset.pattern.permute.xlu0 6
    %1080 = vperm.xlu0 %1079, %v67
    %v1081 = vpop.permute.xlu0 %1080
    %1082 = vset.pattern.permute.xlu0 6
    %1083 = vperm.xlu0 %1082, %v68
    %v1084 = vpop.permute.xlu0 %1083
    %1085 = vset.pattern.permute.xlu0 6
    %1086 = vperm.xlu0 %1085, %v69
    %v1087 = vpop.permute.xlu0 %1086
    %1088 = vset.pattern.permute.xlu0 6
    %1089 = vperm.xlu0 %1088, %v70
    %v1090 = vpop.permute.xlu0 %1089
    %1091 = vset.pattern.permute.xlu0 6
    %1092 = vperm.xlu0 %1091, %v71
    %v1093 = vpop.permute.xlu0 %1092
    %1094 = vset.pattern.permute.xlu0 6
    %1095 = vperm.xlu0 %1094, %v72
    %v1096 = vpop.permute.xlu0 %1095
    %1097 = vset.pattern.permute.xlu0 6
    %1098 = vperm.xlu0 %1097, %v73
    %v1099 = vpop.permute.xlu0 %1098
    %1100 = vset.pattern.permute.xlu0 6
    %1101 = vperm.xlu0 %1100, %v74
    %v1102 = vpop.permute.xlu0 %1101
    %1103 = vset.pattern.permute.xlu0 6
    %1104 = vperm.xlu0 %1103, %v75
    %v1105 = vpop.permute.xlu0 %1104
    %1106 = vset.pattern.permute.xlu0 6
    %1107 = vperm.xlu0 %1106, %v76
    %v1108 = vpop.permute.xlu0 %1107
    %1109 = vset.pattern.permute.xlu0 6
    %1110 = vperm.xlu0 %1109, %v77
    %v1111 = vpop.permute.xlu0 %1110
    %1112 = vset.pattern.permute.xlu0 6
    %1113 = vperm.xlu0 %1112, %v78
    %v1114 = vpop.permute.xlu0 %1113
    %1115 = vset.pattern.permute.xlu0 6
    %1116 = vperm.xlu0 %1115, %v79
    %v1117 = vpop.permute.xlu0 %1116
    %1118 = vset.pattern.permute.xlu0 6
    %1119 = vperm.xlu0 %1118, %v80
    %v1120 = vpop.permute.xlu0 %1119
    %1121 = vset.pattern.permute.xlu0 6
    %1122 = vperm.xlu0 %1121, %v81
    %v1123 = vpop.permute.xlu0 %1122
    %vm1124 = vcmp.eq.s32.totalorder %v1078, %v99
    %vm1125 = vcmp.eq.s32.totalorder %v1081, %v99
    %vm1126 = vcmp.eq.s32.totalorder %v1084, %v99
    %vm1127 = vcmp.eq.s32.totalorder %v1087, %v99
    %vm1128 = vcmp.eq.s32.totalorder %v1090, %v99
    %vm1129 = vcmp.eq.s32.totalorder %v1093, %v99
    %vm1130 = vcmp.eq.s32.totalorder %v1096, %v99
    %vm1131 = vcmp.eq.s32.totalorder %v1099, %v99
    %vm1132 = vcmp.eq.s32.totalorder %v1102, %v99
    %vm1133 = vcmp.eq.s32.totalorder %v1105, %v99
    %vm1134 = vcmp.eq.s32.totalorder %v1108, %v99
    %vm1135 = vcmp.eq.s32.totalorder %v1111, %v99
    %vm1136 = vcmp.eq.s32.totalorder %v1114, %v99
    %vm1137 = vcmp.eq.s32.totalorder %v1117, %v99
    %vm1138 = vcmp.eq.s32.totalorder %v1120, %v99
    %vm1139 = vcmp.eq.s32.totalorder %v1123, %v99
    %1140 = vset.pattern.permute.xlu0 14
    %1141 = vperm.xlu0 %1140, %v82
    %v1142 = vpop.permute.xlu0 %1141
    %1144 = vset.pattern.permute.xlu0 14
    %1145 = vperm.xlu0 %1144, %v83
    %v1146 = vpop.permute.xlu0 %1145
    %1148 = vset.pattern.permute.xlu0 14
    %1149 = vperm.xlu0 %1148, %v84
    %v1150 = vpop.permute.xlu0 %1149
    %1152 = vset.pattern.permute.xlu0 14
    %1153 = vperm.xlu0 %1152, %v85
    %v1154 = vpop.permute.xlu0 %1153
    %1156 = vset.pattern.permute.xlu0 14
    %1157 = vperm.xlu0 %1156, %v86
    %v1158 = vpop.permute.xlu0 %1157
    %1160 = vset.pattern.permute.xlu0 14
    %1161 = vperm.xlu0 %1160, %v87
    %v1162 = vpop.permute.xlu0 %1161
    %1164 = vset.pattern.permute.xlu0 14
    %1165 = vperm.xlu0 %1164, %v88
    %v1166 = vpop.permute.xlu0 %1165
    %1168 = vset.pattern.permute.xlu0 14
    %1169 = vperm.xlu0 %1168, %v89
    %v1170 = vpop.permute.xlu0 %1169
    %1172 = vset.pattern.permute.xlu0 14
    %1173 = vperm.xlu0 %1172, %v90
    %v1174 = vpop.permute.xlu0 %1173
    %1176 = vset.pattern.permute.xlu0 14
    %1177 = vperm.xlu0 %1176, %v91
    %v1178 = vpop.permute.xlu0 %1177
    %1180 = vset.pattern.permute.xlu0 14
    %1181 = vperm.xlu0 %1180, %v92
    %v1182 = vpop.permute.xlu0 %1181
    %1184 = vset.pattern.permute.xlu0 14
    %1185 = vperm.xlu0 %1184, %v93
    %v1186 = vpop.permute.xlu0 %1185
    %1188 = vset.pattern.permute.xlu0 14
    %1189 = vperm.xlu0 %1188, %v94
    %v1190 = vpop.permute.xlu0 %1189
    %1192 = vset.pattern.permute.xlu0 14
    %1193 = vperm.xlu0 %1192, %v95
    %v1194 = vpop.permute.xlu0 %1193
    %1196 = vset.pattern.permute.xlu0 14
    %1197 = vperm.xlu0 %1196, %v96
    %v1198 = vpop.permute.xlu0 %1197
    %1200 = vset.pattern.permute.xlu0 14
    %1201 = vperm.xlu0 %1200, %v97
    %v1202 = vpop.permute.xlu0 %1201
    %v1204 = vsel %vm1124, %v1142, 0.0
    %v1205 = vsel %vm1125, %v1146, 0.0
    %v1206 = vsel %vm1126, %v1150, 0.0
    %v1207 = vsel %vm1127, %v1154, 0.0
    %v1208 = vsel %vm1128, %v1158, 0.0
    %v1209 = vsel %vm1129, %v1162, 0.0
    %v1210 = vsel %vm1130, %v1166, 0.0
    %v1211 = vsel %vm1131, %v1170, 0.0
    %v1212 = vsel %vm1132, %v1174, 0.0
    %v1213 = vsel %vm1133, %v1178, 0.0
    %v1214 = vsel %vm1134, %v1182, 0.0
    %v1215 = vsel %vm1135, %v1186, 0.0
    %v1216 = vsel %vm1136, %v1190, 0.0
    %v1217 = vsel %vm1137, %v1194, 0.0
    %v1218 = vsel %vm1138, %v1198, 0.0
    %v1219 = vsel %vm1139, %v1202, 0.0
    %v1220 = vadd.f32 %v1060, %v1204
    %v1221 = vadd.f32 %v1061, %v1205
    %v1222 = vadd.f32 %v1062, %v1206
    %v1223 = vadd.f32 %v1063, %v1207
    %v1224 = vadd.f32 %v1064, %v1208
    %v1225 = vadd.f32 %v1065, %v1209
    %v1226 = vadd.f32 %v1066, %v1210
    %v1227 = vadd.f32 %v1067, %v1211
    %v1228 = vadd.f32 %v1068, %v1212
    %v1229 = vadd.f32 %v1069, %v1213
    %v1230 = vadd.f32 %v1070, %v1214
    %v1231 = vadd.f32 %v1071, %v1215
    %v1232 = vadd.f32 %v1072, %v1216
    %v1233 = vadd.f32 %v1073, %v1217
    %v1234 = vadd.f32 %v1074, %v1218
    %v1235 = vadd.f32 %v1075, %v1219
    %1236 = vset.pattern.permute.xlu0 7
    %1237 = vperm.xlu0 %1236, %v66
    %v1238 = vpop.permute.xlu0 %1237
    %1239 = vset.pattern.permute.xlu0 7
    %1240 = vperm.xlu0 %1239, %v67
    %v1241 = vpop.permute.xlu0 %1240
    %1242 = vset.pattern.permute.xlu0 7
    %1243 = vperm.xlu0 %1242, %v68
    %v1244 = vpop.permute.xlu0 %1243
    %1245 = vset.pattern.permute.xlu0 7
    %1246 = vperm.xlu0 %1245, %v69
    %v1247 = vpop.permute.xlu0 %1246
    %1248 = vset.pattern.permute.xlu0 7
    %1249 = vperm.xlu0 %1248, %v70
    %v1250 = vpop.permute.xlu0 %1249
    %1251 = vset.pattern.permute.xlu0 7
    %1252 = vperm.xlu0 %1251, %v71
    %v1253 = vpop.permute.xlu0 %1252
    %1254 = vset.pattern.permute.xlu0 7
    %1255 = vperm.xlu0 %1254, %v72
    %v1256 = vpop.permute.xlu0 %1255
    %1257 = vset.pattern.permute.xlu0 7
    %1258 = vperm.xlu0 %1257, %v73
    %v1259 = vpop.permute.xlu0 %1258
    %1260 = vset.pattern.permute.xlu0 7
    %1261 = vperm.xlu0 %1260, %v74
    %v1262 = vpop.permute.xlu0 %1261
    %1263 = vset.pattern.permute.xlu0 7
    %1264 = vperm.xlu0 %1263, %v75
    %v1265 = vpop.permute.xlu0 %1264
    %1266 = vset.pattern.permute.xlu0 7
    %1267 = vperm.xlu0 %1266, %v76
    %v1268 = vpop.permute.xlu0 %1267
    %1269 = vset.pattern.permute.xlu0 7
    %1270 = vperm.xlu0 %1269, %v77
    %v1271 = vpop.permute.xlu0 %1270
    %1272 = vset.pattern.permute.xlu0 7
    %1273 = vperm.xlu0 %1272, %v78
    %v1274 = vpop.permute.xlu0 %1273
    %1275 = vset.pattern.permute.xlu0 7
    %1276 = vperm.xlu0 %1275, %v79
    %v1277 = vpop.permute.xlu0 %1276
    %1278 = vset.pattern.permute.xlu0 7
    %1279 = vperm.xlu0 %1278, %v80
    %v1280 = vpop.permute.xlu0 %1279
    %1281 = vset.pattern.permute.xlu0 7
    %1282 = vperm.xlu0 %1281, %v81
    %v1283 = vpop.permute.xlu0 %1282
    %vm1284 = vcmp.eq.s32.totalorder %v1238, %v99
    %vm1285 = vcmp.eq.s32.totalorder %v1241, %v99
    %vm1286 = vcmp.eq.s32.totalorder %v1244, %v99
    %vm1287 = vcmp.eq.s32.totalorder %v1247, %v99
    %vm1288 = vcmp.eq.s32.totalorder %v1250, %v99
    %vm1289 = vcmp.eq.s32.totalorder %v1253, %v99
    %vm1290 = vcmp.eq.s32.totalorder %v1256, %v99
    %vm1291 = vcmp.eq.s32.totalorder %v1259, %v99
    %vm1292 = vcmp.eq.s32.totalorder %v1262, %v99
    %vm1293 = vcmp.eq.s32.totalorder %v1265, %v99
    %vm1294 = vcmp.eq.s32.totalorder %v1268, %v99
    %vm1295 = vcmp.eq.s32.totalorder %v1271, %v99
    %vm1296 = vcmp.eq.s32.totalorder %v1274, %v99
    %vm1297 = vcmp.eq.s32.totalorder %v1277, %v99
    %vm1298 = vcmp.eq.s32.totalorder %v1280, %v99
    %vm1299 = vcmp.eq.s32.totalorder %v1283, %v99
    %1300 = vset.pattern.permute.xlu0 15
    %1301 = vperm.xlu0 %1300, %v82
    %v1302 = vpop.permute.xlu0 %1301
    %1304 = vset.pattern.permute.xlu0 15
    %1305 = vperm.xlu0 %1304, %v83
    %v1306 = vpop.permute.xlu0 %1305
    %1308 = vset.pattern.permute.xlu0 15
    %1309 = vperm.xlu0 %1308, %v84
    %v1310 = vpop.permute.xlu0 %1309
    %1312 = vset.pattern.permute.xlu0 15
    %1313 = vperm.xlu0 %1312, %v85
    %v1314 = vpop.permute.xlu0 %1313
    %1316 = vset.pattern.permute.xlu0 15
    %1317 = vperm.xlu0 %1316, %v86
    %v1318 = vpop.permute.xlu0 %1317
    %1320 = vset.pattern.permute.xlu0 15
    %1321 = vperm.xlu0 %1320, %v87
    %v1322 = vpop.permute.xlu0 %1321
    %1324 = vset.pattern.permute.xlu0 15
    %1325 = vperm.xlu0 %1324, %v88
    %v1326 = vpop.permute.xlu0 %1325
    %1328 = vset.pattern.permute.xlu0 15
    %1329 = vperm.xlu0 %1328, %v89
    %v1330 = vpop.permute.xlu0 %1329
    %1332 = vset.pattern.permute.xlu0 15
    %1333 = vperm.xlu0 %1332, %v90
    %v1334 = vpop.permute.xlu0 %1333
    %1336 = vset.pattern.permute.xlu0 15
    %1337 = vperm.xlu0 %1336, %v91
    %v1338 = vpop.permute.xlu0 %1337
    %1340 = vset.pattern.permute.xlu0 15
    %1341 = vperm.xlu0 %1340, %v92
    %v1342 = vpop.permute.xlu0 %1341
    %1344 = vset.pattern.permute.xlu0 15
    %1345 = vperm.xlu0 %1344, %v93
    %v1346 = vpop.permute.xlu0 %1345
    %1348 = vset.pattern.permute.xlu0 15
    %1349 = vperm.xlu0 %1348, %v94
    %v1350 = vpop.permute.xlu0 %1349
    %1352 = vset.pattern.permute.xlu0 15
    %1353 = vperm.xlu0 %1352, %v95
    %v1354 = vpop.permute.xlu0 %1353
    %1356 = vset.pattern.permute.xlu0 15
    %1357 = vperm.xlu0 %1356, %v96
    %v1358 = vpop.permute.xlu0 %1357
    %1360 = vset.pattern.permute.xlu0 15
    %1361 = vperm.xlu0 %1360, %v97
    %v1362 = vpop.permute.xlu0 %1361
    %v1364 = vsel %vm1284, %v1302, 0.0
    %v1365 = vsel %vm1285, %v1306, 0.0
    %v1366 = vsel %vm1286, %v1310, 0.0
    %v1367 = vsel %vm1287, %v1314, 0.0
    %v1368 = vsel %vm1288, %v1318, 0.0
    %v1369 = vsel %vm1289, %v1322, 0.0
    %v1370 = vsel %vm1290, %v1326, 0.0
    %v1371 = vsel %vm1291, %v1330, 0.0
    %v1372 = vsel %vm1292, %v1334, 0.0
    %v1373 = vsel %vm1293, %v1338, 0.0
    %v1374 = vsel %vm1294, %v1342, 0.0
    %v1375 = vsel %vm1295, %v1346, 0.0
    %v1376 = vsel %vm1296, %v1350, 0.0
    %v1377 = vsel %vm1297, %v1354, 0.0
    %v1378 = vsel %vm1298, %v1358, 0.0
    %v1379 = vsel %vm1299, %v1362, 0.0
    %v1380 = vadd.f32 %v1220, %v1364
    %v1381 = vadd.f32 %v1221, %v1365
    %v1382 = vadd.f32 %v1222, %v1366
    %v1383 = vadd.f32 %v1223, %v1367
    %v1384 = vadd.f32 %v1224, %v1368
    %v1385 = vadd.f32 %v1225, %v1369
    %v1386 = vadd.f32 %v1226, %v1370
    %v1387 = vadd.f32 %v1227, %v1371
    %v1388 = vadd.f32 %v1228, %v1372
    %v1389 = vadd.f32 %v1229, %v1373
    %v1390 = vadd.f32 %v1230, %v1374
    %v1391 = vadd.f32 %v1231, %v1375
    %v1392 = vadd.f32 %v1232, %v1376
    %v1393 = vadd.f32 %v1233, %v1377
    %v1394 = vadd.f32 %v1234, %v1378
    %v1395 = vadd.f32 %v1235, %v1379
    %v1396 = vpack.c.bf16 %v1381, %v1380
    %v1397 = vpack.c.bf16 %v1383, %v1382
    %v1398 = vpack.c.bf16 %v1385, %v1384
    %v1399 = vpack.c.bf16 %v1387, %v1386
    %v1400 = vpack.c.bf16 %v1389, %v1388
    %v1401 = vpack.c.bf16 %v1391, %v1390
    %v1402 = vpack.c.bf16 %v1393, %v1392
    %v1403 = vpack.c.bf16 %v1395, %v1394
    %v1404 = vld [vmem:[#allocation2] sm:$0xf]
    %v1405 = vld [vmem:[#allocation2 + $0x4] sm:$0xf]
    %v1406 = vld [vmem:[#allocation2 + $0x8] sm:$0xf]
    %v1407 = vld [vmem:[#allocation2 + $0xc] sm:$0xf]
    %v1408 = vld [vmem:[#allocation2 + $0x10] sm:$0xf]
    %v1409 = vld [vmem:[#allocation2 + $0x14] sm:$0xf]
    %v1410 = vld [vmem:[#allocation2 + $0x18] sm:$0xf]
    %v1411 = vld [vmem:[#allocation2 + $0x1c] sm:$0xf]
    %v1412 = vld [vmem:[#allocation2 + $0x20] sm:$0xf]
    %v1413 = vld [vmem:[#allocation2 + $0x24] sm:$0xf]
    %v1414 = vld [vmem:[#allocation2 + $0x28] sm:$0xf]
    %v1415 = vld [vmem:[#allocation2 + $0x2c] sm:$0xf]
    %v1416 = vld [vmem:[#allocation2 + $0x30] sm:$0xf]
    %v1417 = vld [vmem:[#allocation2 + $0x34] sm:$0xf]
    %v1418 = vld [vmem:[#allocation2 + $0x38] sm:$0xf]
    %v1419 = vld [vmem:[#allocation2 + $0x3c] sm:$0xf]
    %v1436 = vunpack.c.l.b16 %v1404
    %v1437 = vunpack.c.l.b16 %v1405
    %v1438 = vunpack.c.l.b16 %v1406
    %v1439 = vunpack.c.l.b16 %v1407
    %v1440 = vunpack.c.l.b16 %v1408
    %v1441 = vunpack.c.l.b16 %v1409
    %v1442 = vunpack.c.l.b16 %v1410
    %v1443 = vunpack.c.l.b16 %v1411
    %v1444 = vunpack.c.l.b16 %v1412
    %v1445 = vunpack.c.l.b16 %v1413
    %v1446 = vunpack.c.l.b16 %v1414
    %v1447 = vunpack.c.l.b16 %v1415
    %v1448 = vunpack.c.l.b16 %v1416
    %v1449 = vunpack.c.l.b16 %v1417
    %v1450 = vunpack.c.l.b16 %v1418
    %v1451 = vunpack.c.l.b16 %v1419
    %v1452 = vpack.c.b16 %v1437, %v1436
    %v1453 = vpack.c.b16 %v1439, %v1438
    %v1454 = vpack.c.b16 %v1441, %v1440
    %v1455 = vpack.c.b16 %v1443, %v1442
    %v1456 = vpack.c.b16 %v1445, %v1444
    %v1457 = vpack.c.b16 %v1447, %v1446
    %v1458 = vpack.c.b16 %v1449, %v1448
    %v1459 = vpack.c.b16 %v1451, %v1450
    %1468 = vmatprep.subr.bf16.mxu0 0
    %1469 = vmatpush1.bf16.msra.mxu0 %v1452
    %1470 = vmatprep.subr.bf16.mxu0 0
    %1471 = vmatpush1.bf16.msra.mxu0 %v1453
    %1472 = vmatprep.subr.bf16.mxu0 0
    %1473 = vmatpush1.bf16.msra.mxu0 %v1454
    %1474 = vmatprep.subr.bf16.mxu0 0
    %1475 = vmatpush1.bf16.msra.mxu0 %v1455
    %1476 = vmatprep.subr.bf16.mxu0 0
    %1477 = vmatpush1.bf16.msra.mxu0 %v1456
    %1478 = vmatprep.subr.bf16.mxu0 0
    %1479 = vmatpush1.bf16.msra.mxu0 %v1457
    %1480 = vmatprep.subr.bf16.mxu0 0
    %1481 = vmatpush1.bf16.msra.mxu0 %v1458
    %1482 = vmatprep.subr.bf16.mxu0 0
    %1483 = vmatpush1.bf16.msra.mxu0 %v1459
    %1484 = vmatprep.subr.bf16.mxu0 0
    %1485 = vmatpush1.bf16.msra.mxu0 0
    %1486 = vmatprep.subr.bf16.mxu0 0
    %1487 = vmatpush1.bf16.msra.mxu0 0
    %1488 = vmatprep.subr.bf16.mxu0 0
    %1489 = vmatpush1.bf16.msra.mxu0 0
    %1490 = vmatprep.subr.bf16.mxu0 0
    %1491 = vmatpush1.bf16.msra.mxu0 0
    %1492 = vmatprep.subr.bf16.mxu0 0
    %1493 = vmatpush1.bf16.msra.mxu0 0
    %1494 = vmatprep.subr.bf16.mxu0 0
    %1495 = vmatpush1.bf16.msra.mxu0 0
    %1496 = vmatprep.subr.bf16.mxu0 0
    %1497 = vmatpush1.bf16.msra.mxu0 0
    %1498 = vmatprep.subr.bf16.mxu0 0
    %1499 = vmatpush1.bf16.msra.mxu0 0
    %1500 = vmatprep.mubr.bf16.mxu0 0
    %1501 = vmatmul.mubr.bf16.gmra.mrb[0].mxu0 %v1396
    %v1502 = vpop.f32.mrb[0].mxu0
    %v1503 = vadd.f32 0.0, %v1502
    %v1504 = vpop.f32.mrb[0].mxu0
    %v1505 = vpop.f32.mrb[0].mxu0
    %v1506 = vadd.f32 0.0, %v1505
    %v1507 = vpop.f32.mrb[0].mxu0
    %1508 = vmatprep.mubr.bf16.mxu0 0
    %1509 = vmatmul.mubr.bf16.gmra.mrb[0].mxu0 %v1397
    %v1510 = vpop.f32.mrb[0].mxu0
    %v1511 = vadd.f32 0.0, %v1510
    %v1512 = vpop.f32.mrb[0].mxu0
    %v1513 = vpop.f32.mrb[0].mxu0
    %v1514 = vadd.f32 0.0, %v1513
    %v1515 = vpop.f32.mrb[0].mxu0
    %1516 = vmatprep.mubr.bf16.mxu0 0
    %1517 = vmatmul.mubr.bf16.gmra.mrb[0].mxu0 %v1398
    %v1518 = vpop.f32.mrb[0].mxu0
    %v1519 = vadd.f32 0.0, %v1518
    %v1520 = vpop.f32.mrb[0].mxu0
    %v1521 = vpop.f32.mrb[0].mxu0
    %v1522 = vadd.f32 0.0, %v1521
    %v1523 = vpop.f32.mrb[0].mxu0
    %1524 = vmatprep.mubr.bf16.mxu0 0
    %1525 = vmatmul.mubr.bf16.gmra.mrb[0].mxu0 %v1399
    %v1526 = vpop.f32.mrb[0].mxu0
    %v1527 = vadd.f32 0.0, %v1526
    %v1528 = vpop.f32.mrb[0].mxu0
    %v1529 = vpop.f32.mrb[0].mxu0
    %v1530 = vadd.f32 0.0, %v1529
    %v1531 = vpop.f32.mrb[0].mxu0
    %1532 = vmatprep.mubr.bf16.mxu0 0
    %1533 = vmatmul.mubr.bf16.gmra.mrb[0].mxu0 %v1400
    %v1534 = vpop.f32.mrb[0].mxu0
    %v1535 = vadd.f32 0.0, %v1534
    %v1536 = vpop.f32.mrb[0].mxu0
    %v1537 = vpop.f32.mrb[0].mxu0
    %v1538 = vadd.f32 0.0, %v1537
    %v1539 = vpop.f32.mrb[0].mxu0
    %1540 = vmatprep.mubr.bf16.mxu0 0
    %1541 = vmatmul.mubr.bf16.gmra.mrb[0].mxu0 %v1401
    %v1542 = vpop.f32.mrb[0].mxu0
    %v1543 = vadd.f32 0.0, %v1542
    %v1544 = vpop.f32.mrb[0].mxu0
    %v1545 = vpop.f32.mrb[0].mxu0
    %v1546 = vadd.f32 0.0, %v1545
    %v1547 = vpop.f32.mrb[0].mxu0
    %1548 = vmatprep.mubr.bf16.mxu0 0
    %1549 = vmatmul.mubr.bf16.gmra.mrb[0].mxu0 %v1402
    %v1550 = vpop.f32.mrb[0].mxu0
    %v1551 = vadd.f32 0.0, %v1550
    %v1552 = vpop.f32.mrb[0].mxu0
    %v1553 = vpop.f32.mrb[0].mxu0
    %v1554 = vadd.f32 0.0, %v1553
    %v1555 = vpop.f32.mrb[0].mxu0
    %1556 = vmatprep.mubr.bf16.mxu0 0
    %1557 = vmatmul.mubr.bf16.gmra.mrb[0].mxu0 %v1403
    %v1558 = vpop.f32.mrb[0].mxu0
    %v1559 = vadd.f32 0.0, %v1558
    %v1560 = vpop.f32.mrb[0].mxu0
    %v1561 = vpop.f32.mrb[0].mxu0
    %v1562 = vadd.f32 0.0, %v1561
    %v1563 = vpop.f32.mrb[0].mxu0
    %1564 = vdwg.mxu0
    %1565 = vrot.lane.b32.xlu0 %v82, 120
    %v1566 = vpop.permute.xlu0 %1565
    %1567 = vrot.lane.b32.xlu0 %v83, 120
    %v1568 = vpop.permute.xlu0 %1567
    %1569 = vrot.lane.b32.xlu0 %v84, 120
    %v1570 = vpop.permute.xlu0 %1569
    %1571 = vrot.lane.b32.xlu0 %v85, 120
    %v1572 = vpop.permute.xlu0 %1571
    %1573 = vrot.lane.b32.xlu0 %v86, 120
    %v1574 = vpop.permute.xlu0 %1573
    %1575 = vrot.lane.b32.xlu0 %v87, 120
    %v1576 = vpop.permute.xlu0 %1575
    %1577 = vrot.lane.b32.xlu0 %v88, 120
    %v1578 = vpop.permute.xlu0 %1577
    %1579 = vrot.lane.b32.xlu0 %v89, 120
    %v1580 = vpop.permute.xlu0 %1579
    %1581 = vrot.lane.b32.xlu0 %v90, 120
    %v1582 = vpop.permute.xlu0 %1581
    %1583 = vrot.lane.b32.xlu0 %v91, 120
    %v1584 = vpop.permute.xlu0 %1583
    %1585 = vrot.lane.b32.xlu0 %v92, 120
    %v1586 = vpop.permute.xlu0 %1585
    %1587 = vrot.lane.b32.xlu0 %v93, 120
    %v1588 = vpop.permute.xlu0 %1587
    %1589 = vrot.lane.b32.xlu0 %v94, 120
    %v1590 = vpop.permute.xlu0 %1589
    %1591 = vrot.lane.b32.xlu0 %v95, 120
    %v1592 = vpop.permute.xlu0 %1591
    %1593 = vrot.lane.b32.xlu0 %v96, 120
    %v1594 = vpop.permute.xlu0 %1593
    %1595 = vrot.lane.b32.xlu0 %v97, 120
    %v1596 = vpop.permute.xlu0 %1595
    %vm1613 = vcmask 64512
    %v1614 = vsel %vm1613, %v1566, 0.0
    %1615 = vadd.xlane.f32.xlu0 %v1614
    %v1616 = vpop.xlane.xlu0 %1615
    %v1617 = vsel %vm1613, %v1568, 0.0
    %1618 = vadd.xlane.f32.xlu0 %v1617
    %v1619 = vpop.xlane.xlu0 %1618
    %v1620 = vsel %vm1613, %v1570, 0.0
    %1621 = vadd.xlane.f32.xlu0 %v1620
    %v1622 = vpop.xlane.xlu0 %1621
    %v1623 = vsel %vm1613, %v1572, 0.0
    %1624 = vadd.xlane.f32.xlu0 %v1623
    %v1625 = vpop.xlane.xlu0 %1624
    %v1626 = vsel %vm1613, %v1574, 0.0
    %1627 = vadd.xlane.f32.xlu0 %v1626
    %v1628 = vpop.xlane.xlu0 %1627
    %v1629 = vsel %vm1613, %v1576, 0.0
    %1630 = vadd.xlane.f32.xlu0 %v1629
    %v1631 = vpop.xlane.xlu0 %1630
    %v1632 = vsel %vm1613, %v1578, 0.0
    %1633 = vadd.xlane.f32.xlu0 %v1632
    %v1634 = vpop.xlane.xlu0 %1633
    %v1635 = vsel %vm1613, %v1580, 0.0
    %1636 = vadd.xlane.f32.xlu0 %v1635
    %v1637 = vpop.xlane.xlu0 %1636
    %v1638 = vsel %vm1613, %v1582, 0.0
    %1639 = vadd.xlane.f32.xlu0 %v1638
    %v1640 = vpop.xlane.xlu0 %1639
    %v1641 = vsel %vm1613, %v1584, 0.0
    %1642 = vadd.xlane.f32.xlu0 %v1641
    %v1643 = vpop.xlane.xlu0 %1642
    %v1644 = vsel %vm1613, %v1586, 0.0
    %1645 = vadd.xlane.f32.xlu0 %v1644
    %v1646 = vpop.xlane.xlu0 %1645
    %v1647 = vsel %vm1613, %v1588, 0.0
    %1648 = vadd.xlane.f32.xlu0 %v1647
    %v1649 = vpop.xlane.xlu0 %1648
    %v1650 = vsel %vm1613, %v1590, 0.0
    %1651 = vadd.xlane.f32.xlu0 %v1650
    %v1652 = vpop.xlane.xlu0 %1651
    %v1653 = vsel %vm1613, %v1592, 0.0
    %1654 = vadd.xlane.f32.xlu0 %v1653
    %v1655 = vpop.xlane.xlu0 %1654
    %v1656 = vsel %vm1613, %v1594, 0.0
    %1657 = vadd.xlane.f32.xlu0 %v1656
    %v1658 = vpop.xlane.xlu0 %1657
    %v1659 = vsel %vm1613, %v1596, 0.0
    %1660 = vadd.xlane.f32.xlu0 %v1659
    %v1661 = vpop.xlane.xlu0 %1660
    %v1662 = vmax.f32 %v1616, 1e-06
    %v1663 = vmax.f32 %v1619, 1e-06
    %v1664 = vmax.f32 %v1622, 1e-06
    %v1665 = vmax.f32 %v1625, 1e-06
    %v1666 = vmax.f32 %v1628, 1e-06
    %v1667 = vmax.f32 %v1631, 1e-06
    %v1668 = vmax.f32 %v1634, 1e-06
    %v1669 = vmax.f32 %v1637, 1e-06
    %v1670 = vmax.f32 %v1640, 1e-06
    %v1671 = vmax.f32 %v1643, 1e-06
    %v1672 = vmax.f32 %v1646, 1e-06
    %v1673 = vmax.f32 %v1649, 1e-06
    %v1674 = vmax.f32 %v1652, 1e-06
    %v1675 = vmax.f32 %v1655, 1e-06
    %v1676 = vmax.f32 %v1658, 1e-06
    %v1677 = vmax.f32 %v1661, 1e-06
    %v1678 = vrcp.pop %v1662
    %v1679 = vrcp.pop %v1663
    %v1680 = vrcp.pop %v1664
    %v1681 = vrcp.pop %v1665
    %v1682 = vrcp.pop %v1666
    %v1683 = vrcp.pop %v1667
    %v1684 = vrcp.pop %v1668
    %v1685 = vrcp.pop %v1669
    %v1686 = vrcp.pop %v1670
    %v1687 = vrcp.pop %v1671
    %v1688 = vrcp.pop %v1672
    %v1689 = vrcp.pop %v1673
    %v1690 = vrcp.pop %v1674
    %v1691 = vrcp.pop %v1675
    %v1692 = vrcp.pop %v1676
    %v1693 = vrcp.pop %v1677
    %v1694 = vmul.f32 %v1503, %v1678
    %v1695 = vmul.f32 %v1506, %v1679
    %v1696 = vmul.f32 %v1511, %v1680
    %v1697 = vmul.f32 %v1514, %v1681
    %v1698 = vmul.f32 %v1519, %v1682
    %v1699 = vmul.f32 %v1522, %v1683
    %v1700 = vmul.f32 %v1527, %v1684
    %v1701 = vmul.f32 %v1530, %v1685
    %v1702 = vmul.f32 %v1535, %v1686
    %v1703 = vmul.f32 %v1538, %v1687
    %v1704 = vmul.f32 %v1543, %v1688
    %v1705 = vmul.f32 %v1546, %v1689
    %v1706 = vmul.f32 %v1551, %v1690
    %v1707 = vmul.f32 %v1554, %v1691
    %v1708 = vmul.f32 %v1559, %v1692
    %v1709 = vmul.f32 %v1562, %v1693
    %v1710 = vld [vmem:[%s5] sm:$0xff]
    %v1711 = vpack.c.bf16 %v1695, %v1694
    %v1712 = vpack.c.bf16 %v1697, %v1696
    %v1713 = vpack.c.bf16 %v1699, %v1698
    %v1714 = vpack.c.bf16 %v1701, %v1700
    %v1715 = vpack.c.bf16 %v1703, %v1702
    %v1716 = vpack.c.bf16 %v1705, %v1704
    %v1717 = vpack.c.bf16 %v1707, %v1706
    %v1718 = vpack.c.bf16 %v1709, %v1708
    %v1719 = vpack.c.bf16 %v83, %v82
    %v1720 = vpack.c.bf16 %v85, %v84
    %v1721 = vpack.c.bf16 %v87, %v86
    %v1722 = vpack.c.bf16 %v89, %v88
    %v1723 = vpack.c.bf16 %v91, %v90
    %v1724 = vpack.c.bf16 %v93, %v92
    %v1725 = vpack.c.bf16 %v95, %v94
    %v1726 = vpack.c.bf16 %v97, %v96
    %v1727 = vld [vmem:[#allocation5] sm:$0xff]
    %v1728 = vld [vmem:[#allocation5 + $0x8] sm:$0xff]
    %v1729 = vld [vmem:[#allocation5 + $0x10] sm:$0xff]
    %v1730 = vld [vmem:[#allocation5 + $0x18] sm:$0xff]
    %v1731 = vld [vmem:[#allocation5 + $0x20] sm:$0xff]
    %v1732 = vld [vmem:[#allocation5 + $0x28] sm:$0xff]
    %v1733 = vld [vmem:[#allocation5 + $0x30] sm:$0xff]
    %v1734 = vld [vmem:[#allocation5 + $0x38] sm:$0xff]
    %v1735 = vld [vmem:[#allocation5 + $0x40] sm:$0xff]
    %v1736 = vld [vmem:[#allocation5 + $0x48] sm:$0xff]
    %v1737 = vld [vmem:[#allocation5 + $0x50] sm:$0xff]
    %v1738 = vld [vmem:[#allocation5 + $0x58] sm:$0xff]
    %v1739 = vld [vmem:[#allocation5 + $0x60] sm:$0xff]
    %v1740 = vld [vmem:[#allocation5 + $0x68] sm:$0xff]
    %v1741 = vld [vmem:[#allocation5 + $0x70] sm:$0xff]
    %v1742 = vld [vmem:[#allocation5 + $0x78] sm:$0xff]
    %v1743 = vld [vmem:[#allocation5 + $0x80] sm:$0xff]
    %v1744 = vld [vmem:[#allocation5 + $0x88] sm:$0xff]
    %v1745 = vld [vmem:[#allocation5 + $0x90] sm:$0xff]
    %v1746 = vld [vmem:[#allocation5 + $0x98] sm:$0xff]
    %v1747 = vld [vmem:[#allocation5 + $0xa0] sm:$0xff]
    %v1748 = vld [vmem:[#allocation5 + $0xa8] sm:$0xff]
    %v1749 = vld [vmem:[#allocation5 + $0xb0] sm:$0xff]
    %v1750 = vld [vmem:[#allocation5 + $0xb8] sm:$0xff]
    %v1751 = vld [vmem:[#allocation5 + $0xc0] sm:$0xff]
    %v1752 = vld [vmem:[#allocation5 + $0xc8] sm:$0xff]
    %v1753 = vld [vmem:[#allocation5 + $0xd0] sm:$0xff]
    %v1754 = vld [vmem:[#allocation5 + $0xd8] sm:$0xff]
    %v1755 = vld [vmem:[#allocation5 + $0xe0] sm:$0xff]
    %v1756 = vld [vmem:[#allocation5 + $0xe8] sm:$0xff]
    %v1757 = vld [vmem:[#allocation5 + $0xf0] sm:$0xff]
    %v1758 = vld [vmem:[#allocation5 + $0xf8] sm:$0xff]
    %v1760 = vlaneseq
    %v1761 = vshrl.u32 %v1760, 7
    %v1762 = vsub.s32 0, %v1761
    %v1763 = vrot.slane %v1710, %v1762
    %v1764 = vlaneseq
    %v1765 = vshrl.u32 %v1764, 7
    %v1766 = vsub.s32 4, %v1765
    %v1767 = vrot.slane %v1710, %v1766
    %v1770 = vlaneseq
    %v1771 = vshrl.u32 %v1770, 7
    %v1772 = vsub.s32 0, %v1771
    %v1773 = vrot.slane %v1763, %v1772
    %v1774 = vlaneseq
    %v1775 = vshrl.u32 %v1774, 7
    %v1776 = vsub.s32 0, %v1775
    %v1777 = vrot.slane %v1767, %v1776
    %v1810 = vunpack.c.l.b16 %v1727
    %v1811 = vunpack.c.h.b16 %v1727
    %v1812 = vunpack.c.l.b16 %v1728
    %v1813 = vunpack.c.h.b16 %v1728
    %v1814 = vunpack.c.l.b16 %v1729
    %v1815 = vunpack.c.h.b16 %v1729
    %v1816 = vunpack.c.l.b16 %v1730
    %v1817 = vunpack.c.h.b16 %v1730
    %v1818 = vunpack.c.l.b16 %v1731
    %v1819 = vunpack.c.h.b16 %v1731
    %v1820 = vunpack.c.l.b16 %v1732
    %v1821 = vunpack.c.h.b16 %v1732
    %v1822 = vunpack.c.l.b16 %v1733
    %v1823 = vunpack.c.h.b16 %v1733
    %v1824 = vunpack.c.l.b16 %v1734
    %v1825 = vunpack.c.h.b16 %v1734
    %v1826 = vunpack.c.l.b16 %v1735
    %v1827 = vunpack.c.h.b16 %v1735
    %v1828 = vunpack.c.l.b16 %v1736
    %v1829 = vunpack.c.h.b16 %v1736
    %v1830 = vunpack.c.l.b16 %v1737
    %v1831 = vunpack.c.h.b16 %v1737
    %v1832 = vunpack.c.l.b16 %v1738
    %v1833 = vunpack.c.h.b16 %v1738
    %v1834 = vunpack.c.l.b16 %v1739
    %v1835 = vunpack.c.h.b16 %v1739
    %v1836 = vunpack.c.l.b16 %v1740
    %v1837 = vunpack.c.h.b16 %v1740
    %v1838 = vunpack.c.l.b16 %v1741
    %v1839 = vunpack.c.h.b16 %v1741
    %v1840 = vunpack.c.l.b16 %v1742
    %v1841 = vunpack.c.h.b16 %v1742
    %v1842 = vunpack.c.l.b16 %v1743
    %v1843 = vunpack.c.h.b16 %v1743
    %v1844 = vunpack.c.l.b16 %v1744
    %v1845 = vunpack.c.h.b16 %v1744
    %v1846 = vunpack.c.l.b16 %v1745
    %v1847 = vunpack.c.h.b16 %v1745
    %v1848 = vunpack.c.l.b16 %v1746
    %v1849 = vunpack.c.h.b16 %v1746
    %v1850 = vunpack.c.l.b16 %v1747
    %v1851 = vunpack.c.h.b16 %v1747
    %v1852 = vunpack.c.l.b16 %v1748
    %v1853 = vunpack.c.h.b16 %v1748
    %v1854 = vunpack.c.l.b16 %v1749
    %v1855 = vunpack.c.h.b16 %v1749
    %v1856 = vunpack.c.l.b16 %v1750
    %v1857 = vunpack.c.h.b16 %v1750
    %v1858 = vunpack.c.l.b16 %v1751
    %v1859 = vunpack.c.h.b16 %v1751
    %v1860 = vunpack.c.l.b16 %v1752
    %v1861 = vunpack.c.h.b16 %v1752
    %v1862 = vunpack.c.l.b16 %v1753
    %v1863 = vunpack.c.h.b16 %v1753
    %v1864 = vunpack.c.l.b16 %v1754
    %v1865 = vunpack.c.h.b16 %v1754
    %v1866 = vunpack.c.l.b16 %v1755
    %v1867 = vunpack.c.h.b16 %v1755
    %v1868 = vunpack.c.l.b16 %v1756
    %v1869 = vunpack.c.h.b16 %v1756
    %v1870 = vunpack.c.l.b16 %v1757
    %v1871 = vunpack.c.h.b16 %v1757
    %v1872 = vunpack.c.l.b16 %v1758
    %v1873 = vunpack.c.h.b16 %v1758
    %v1874 = vpack.c.b16 %v1812, %v1810
    %v1875 = vpack.c.b16 %v1813, %v1811
    %v1876 = vpack.c.b16 %v1816, %v1814
    %v1877 = vpack.c.b16 %v1817, %v1815
    %v1878 = vpack.c.b16 %v1820, %v1818
    %v1879 = vpack.c.b16 %v1821, %v1819
    %v1880 = vpack.c.b16 %v1824, %v1822
    %v1881 = vpack.c.b16 %v1825, %v1823
    %v1882 = vpack.c.b16 %v1828, %v1826
    %v1883 = vpack.c.b16 %v1829, %v1827
    %v1884 = vpack.c.b16 %v1832, %v1830
    %v1885 = vpack.c.b16 %v1833, %v1831
    %v1886 = vpack.c.b16 %v1836, %v1834
    %v1887 = vpack.c.b16 %v1837, %v1835
    %v1888 = vpack.c.b16 %v1840, %v1838
    %v1889 = vpack.c.b16 %v1841, %v1839
    %v1890 = vpack.c.b16 %v1844, %v1842
    %v1891 = vpack.c.b16 %v1845, %v1843
    %v1892 = vpack.c.b16 %v1848, %v1846
    %v1893 = vpack.c.b16 %v1849, %v1847
    %v1894 = vpack.c.b16 %v1852, %v1850
    %v1895 = vpack.c.b16 %v1853, %v1851
    %v1896 = vpack.c.b16 %v1856, %v1854
    %v1897 = vpack.c.b16 %v1857, %v1855
    %v1898 = vpack.c.b16 %v1860, %v1858
    %v1899 = vpack.c.b16 %v1861, %v1859
    %v1900 = vpack.c.b16 %v1864, %v1862
    %v1901 = vpack.c.b16 %v1865, %v1863
    %v1902 = vpack.c.b16 %v1868, %v1866
    %v1903 = vpack.c.b16 %v1869, %v1867
    %v1904 = vpack.c.b16 %v1872, %v1870
    %v1905 = vpack.c.b16 %v1873, %v1871
    %1938 = vmatprep.subr.bf16.mxu0 %v1875
    %1939 = vmatpush1.bf16.msra.mxu0 %v1874
    %1940 = vmatprep.subr.bf16.mxu0 %v1877
    %1941 = vmatpush1.bf16.msra.mxu0 %v1876
    %1942 = vmatprep.subr.bf16.mxu0 %v1879
    %1943 = vmatpush1.bf16.msra.mxu0 %v1878
    %1944 = vmatprep.subr.bf16.mxu0 %v1881
    %1945 = vmatpush1.bf16.msra.mxu0 %v1880
    %1946 = vmatprep.subr.bf16.mxu0 %v1883
    %1947 = vmatpush1.bf16.msra.mxu0 %v1882
    %1948 = vmatprep.subr.bf16.mxu0 %v1885
    %1949 = vmatpush1.bf16.msra.mxu0 %v1884
    %1950 = vmatprep.subr.bf16.mxu0 %v1887
    %1951 = vmatpush1.bf16.msra.mxu0 %v1886
    %1952 = vmatprep.subr.bf16.mxu0 %v1889
    %1953 = vmatpush1.bf16.msra.mxu0 %v1888
    %1954 = vmatprep.subr.bf16.mxu0 %v1891
    %1955 = vmatpush1.bf16.msra.mxu0 %v1890
    %1956 = vmatprep.subr.bf16.mxu0 %v1893
    %1957 = vmatpush1.bf16.msra.mxu0 %v1892
    %1958 = vmatprep.subr.bf16.mxu0 %v1895
    %1959 = vmatpush1.bf16.msra.mxu0 %v1894
    %1960 = vmatprep.subr.bf16.mxu0 %v1897
    %1961 = vmatpush1.bf16.msra.mxu0 %v1896
    %1962 = vmatprep.subr.bf16.mxu0 %v1899
    %1963 = vmatpush1.bf16.msra.mxu0 %v1898
    %1964 = vmatprep.subr.bf16.mxu0 %v1901
    %1965 = vmatpush1.bf16.msra.mxu0 %v1900
    %1966 = vmatprep.subr.bf16.mxu0 %v1903
    %1967 = vmatpush1.bf16.msra.mxu0 %v1902
    %1968 = vmatprep.subr.bf16.mxu0 %v1905
    %1969 = vmatpush1.bf16.msra.mxu0 %v1904
    %1970 = vmatprep.mubr.bf16.mxu0 %v1719
    %1971 = vmatmul.mubr.bf16.gmra.mrb[0].mxu0 %v1711
    %v1972 = vpop.f32.mrb[0].mxu0
    %v1973 = vadd.f32 %v1773, %v1972
    %v1974 = vpop.f32.mrb[0].mxu0
    %v1975 = vadd.f32 %v1777, %v1974
    %v1976 = vpop.f32.mrb[0].mxu0
    %v1977 = vadd.f32 %v1773, %v1976
    %v1978 = vpop.f32.mrb[0].mxu0
    %v1979 = vadd.f32 %v1777, %v1978
    %1980 = vmatprep.mubr.bf16.mxu0 %v1720
    %1981 = vmatmul.mubr.bf16.gmra.mrb[0].mxu0 %v1712
    %v1982 = vpop.f32.mrb[0].mxu0
    %v1983 = vadd.f32 %v1773, %v1982
    %v1984 = vpop.f32.mrb[0].mxu0
    %v1985 = vadd.f32 %v1777, %v1984
    %v1986 = vpop.f32.mrb[0].mxu0
    %v1987 = vadd.f32 %v1773, %v1986
    %v1988 = vpop.f32.mrb[0].mxu0
    %v1989 = vadd.f32 %v1777, %v1988
    %1990 = vmatprep.mubr.bf16.mxu0 %v1721
    %1991 = vmatmul.mubr.bf16.gmra.mrb[0].mxu0 %v1713
    %v1992 = vpop.f32.mrb[0].mxu0
    %v1993 = vadd.f32 %v1773, %v1992
    %v1994 = vpop.f32.mrb[0].mxu0
    %v1995 = vadd.f32 %v1777, %v1994
    %v1996 = vpop.f32.mrb[0].mxu0
    %v1997 = vadd.f32 %v1773, %v1996
    %v1998 = vpop.f32.mrb[0].mxu0
    %v1999 = vadd.f32 %v1777, %v1998
    %2000 = vmatprep.mubr.bf16.mxu0 %v1722
    %2001 = vmatmul.mubr.bf16.gmra.mrb[0].mxu0 %v1714
    %v2002 = vpop.f32.mrb[0].mxu0
    %v2003 = vadd.f32 %v1773, %v2002
    %v2004 = vpop.f32.mrb[0].mxu0
    %v2005 = vadd.f32 %v1777, %v2004
    %v2006 = vpop.f32.mrb[0].mxu0
    %v2007 = vadd.f32 %v1773, %v2006
    %v2008 = vpop.f32.mrb[0].mxu0
    %v2009 = vadd.f32 %v1777, %v2008
    %2010 = vmatprep.mubr.bf16.mxu0 %v1723
    %2011 = vmatmul.mubr.bf16.gmra.mrb[0].mxu0 %v1715
    %v2012 = vpop.f32.mrb[0].mxu0
    %v2013 = vadd.f32 %v1773, %v2012
    %v2014 = vpop.f32.mrb[0].mxu0
    %v2015 = vadd.f32 %v1777, %v2014
    %v2016 = vpop.f32.mrb[0].mxu0
    %v2017 = vadd.f32 %v1773, %v2016
    %v2018 = vpop.f32.mrb[0].mxu0
    %v2019 = vadd.f32 %v1777, %v2018
    %2020 = vmatprep.mubr.bf16.mxu0 %v1724
    %2021 = vmatmul.mubr.bf16.gmra.mrb[0].mxu0 %v1716
    %v2022 = vpop.f32.mrb[0].mxu0
    %v2023 = vadd.f32 %v1773, %v2022
    %v2024 = vpop.f32.mrb[0].mxu0
    %v2025 = vadd.f32 %v1777, %v2024
    %v2026 = vpop.f32.mrb[0].mxu0
    %v2027 = vadd.f32 %v1773, %v2026
    %v2028 = vpop.f32.mrb[0].mxu0
    %v2029 = vadd.f32 %v1777, %v2028
    %2030 = vmatprep.mubr.bf16.mxu0 %v1725
    %2031 = vmatmul.mubr.bf16.gmra.mrb[0].mxu0 %v1717
    %v2032 = vpop.f32.mrb[0].mxu0
    %v2033 = vadd.f32 %v1773, %v2032
    %v2034 = vpop.f32.mrb[0].mxu0
    %v2035 = vadd.f32 %v1777, %v2034
    %v2036 = vpop.f32.mrb[0].mxu0
    %v2037 = vadd.f32 %v1773, %v2036
    %v2038 = vpop.f32.mrb[0].mxu0
    %v2039 = vadd.f32 %v1777, %v2038
    %2040 = vmatprep.mubr.bf16.mxu0 %v1726
    %2041 = vmatmul.mubr.bf16.gmra.mrb[0].mxu0 %v1718
    %v2042 = vpop.f32.mrb[0].mxu0
    %v2043 = vadd.f32 %v1773, %v2042
    %v2044 = vpop.f32.mrb[0].mxu0
    %v2045 = vadd.f32 %v1777, %v2044
    %v2046 = vpop.f32.mrb[0].mxu0
    %v2047 = vadd.f32 %v1773, %v2046
    %v2048 = vpop.f32.mrb[0].mxu0
    %v2049 = vadd.f32 %v1777, %v2048
    %2050 = vdwg.mxu0
    %v2051 = vmax.f32 %v1973, 0.0
    %v2052 = vmax.f32 %v1975, 0.0
    %v2053 = vmax.f32 %v1977, 0.0
    %v2054 = vmax.f32 %v1979, 0.0
    %v2055 = vmax.f32 %v1983, 0.0
    %v2056 = vmax.f32 %v1985, 0.0
    %v2057 = vmax.f32 %v1987, 0.0
    %v2058 = vmax.f32 %v1989, 0.0
    %v2059 = vmax.f32 %v1993, 0.0
    %v2060 = vmax.f32 %v1995, 0.0
    %v2061 = vmax.f32 %v1997, 0.0
    %v2062 = vmax.f32 %v1999, 0.0
    %v2063 = vmax.f32 %v2003, 0.0
    %v2064 = vmax.f32 %v2005, 0.0
    %v2065 = vmax.f32 %v2007, 0.0
    %v2066 = vmax.f32 %v2009, 0.0
    %v2067 = vmax.f32 %v2013, 0.0
    %v2068 = vmax.f32 %v2015, 0.0
    %v2069 = vmax.f32 %v2017, 0.0
    %v2070 = vmax.f32 %v2019, 0.0
    %v2071 = vmax.f32 %v2023, 0.0
    %v2072 = vmax.f32 %v2025, 0.0
    %v2073 = vmax.f32 %v2027, 0.0
    %v2074 = vmax.f32 %v2029, 0.0
    %v2075 = vmax.f32 %v2033, 0.0
    %v2076 = vmax.f32 %v2035, 0.0
    %v2077 = vmax.f32 %v2037, 0.0
    %v2078 = vmax.f32 %v2039, 0.0
    %v2079 = vmax.f32 %v2043, 0.0
    %v2080 = vmax.f32 %v2045, 0.0
    %v2081 = vmax.f32 %v2047, 0.0
    %v2082 = vmax.f32 %v2049, 0.0
    %v2083 = vpack.c.bf16 %v2053, %v2051
    %v2084 = vpack.c.bf16 %v2054, %v2052
    %v2085 = vpack.c.bf16 %v2057, %v2055
    %v2086 = vpack.c.bf16 %v2058, %v2056
    %v2087 = vpack.c.bf16 %v2061, %v2059
    %v2088 = vpack.c.bf16 %v2062, %v2060
    %v2089 = vpack.c.bf16 %v2065, %v2063
    %v2090 = vpack.c.bf16 %v2066, %v2064
    %v2091 = vpack.c.bf16 %v2069, %v2067
    %v2092 = vpack.c.bf16 %v2070, %v2068
    %v2093 = vpack.c.bf16 %v2073, %v2071
    %v2094 = vpack.c.bf16 %v2074, %v2072
    %v2095 = vpack.c.bf16 %v2077, %v2075
    %v2096 = vpack.c.bf16 %v2078, %v2076
    %v2097 = vpack.c.bf16 %v2081, %v2079
    %v2098 = vpack.c.bf16 %v2082, %v2080
    %v2099 = vld [vmem:[#allocation7] sm:$0xf]
    %v2100 = vld [vmem:[#allocation7 + $0x4] sm:$0xf]
    %v2101 = vld [vmem:[#allocation7 + $0x8] sm:$0xf]
    %v2102 = vld [vmem:[#allocation7 + $0xc] sm:$0xf]
    %v2103 = vld [vmem:[#allocation7 + $0x10] sm:$0xf]
    %v2104 = vld [vmem:[#allocation7 + $0x14] sm:$0xf]
    %v2105 = vld [vmem:[#allocation7 + $0x18] sm:$0xf]
    %v2106 = vld [vmem:[#allocation7 + $0x1c] sm:$0xf]
    %v2107 = vld [vmem:[#allocation7 + $0x20] sm:$0xf]
    %v2108 = vld [vmem:[#allocation7 + $0x24] sm:$0xf]
    %v2109 = vld [vmem:[#allocation7 + $0x28] sm:$0xf]
    %v2110 = vld [vmem:[#allocation7 + $0x2c] sm:$0xf]
    %v2111 = vld [vmem:[#allocation7 + $0x30] sm:$0xf]
    %v2112 = vld [vmem:[#allocation7 + $0x34] sm:$0xf]
    %v2113 = vld [vmem:[#allocation7 + $0x38] sm:$0xf]
    %v2114 = vld [vmem:[#allocation7 + $0x3c] sm:$0xf]
    %v2115 = vld [vmem:[#allocation7 + $0x40] sm:$0xf]
    %v2116 = vld [vmem:[#allocation7 + $0x44] sm:$0xf]
    %v2117 = vld [vmem:[#allocation7 + $0x48] sm:$0xf]
    %v2118 = vld [vmem:[#allocation7 + $0x4c] sm:$0xf]
    %v2119 = vld [vmem:[#allocation7 + $0x50] sm:$0xf]
    %v2120 = vld [vmem:[#allocation7 + $0x54] sm:$0xf]
    %v2121 = vld [vmem:[#allocation7 + $0x58] sm:$0xf]
    %v2122 = vld [vmem:[#allocation7 + $0x5c] sm:$0xf]
    %v2123 = vld [vmem:[#allocation7 + $0x60] sm:$0xf]
    %v2124 = vld [vmem:[#allocation7 + $0x64] sm:$0xf]
    %v2125 = vld [vmem:[#allocation7 + $0x68] sm:$0xf]
    %v2126 = vld [vmem:[#allocation7 + $0x6c] sm:$0xf]
    %v2127 = vld [vmem:[#allocation7 + $0x70] sm:$0xf]
    %v2128 = vld [vmem:[#allocation7 + $0x74] sm:$0xf]
    %v2129 = vld [vmem:[#allocation7 + $0x78] sm:$0xf]
    %v2130 = vld [vmem:[#allocation7 + $0x7c] sm:$0xf]
    %v2131 = vlaneseq
    %v2132 = vshrl.u32 %v2131, 7
    %v2133 = vsub.s32 1, %v2132
    %v2134 = vrot.slane %v1710, %v2133
    %v2167 = vunpack.c.l.b16 %v2099
    %v2168 = vunpack.c.l.b16 %v2100
    %v2169 = vunpack.c.l.b16 %v2101
    %v2170 = vunpack.c.l.b16 %v2102
    %v2171 = vunpack.c.l.b16 %v2103
    %v2172 = vunpack.c.l.b16 %v2104
    %v2173 = vunpack.c.l.b16 %v2105
    %v2174 = vunpack.c.l.b16 %v2106
    %v2175 = vunpack.c.l.b16 %v2107
    %v2176 = vunpack.c.l.b16 %v2108
    %v2177 = vunpack.c.l.b16 %v2109
    %v2178 = vunpack.c.l.b16 %v2110
    %v2179 = vunpack.c.l.b16 %v2111
    %v2180 = vunpack.c.l.b16 %v2112
    %v2181 = vunpack.c.l.b16 %v2113
    %v2182 = vunpack.c.l.b16 %v2114
    %v2183 = vunpack.c.l.b16 %v2115
    %v2184 = vunpack.c.l.b16 %v2116
    %v2185 = vunpack.c.l.b16 %v2117
    %v2186 = vunpack.c.l.b16 %v2118
    %v2187 = vunpack.c.l.b16 %v2119
    %v2188 = vunpack.c.l.b16 %v2120
    %v2189 = vunpack.c.l.b16 %v2121
    %v2190 = vunpack.c.l.b16 %v2122
    %v2191 = vunpack.c.l.b16 %v2123
    %v2192 = vunpack.c.l.b16 %v2124
    %v2193 = vunpack.c.l.b16 %v2125
    %v2194 = vunpack.c.l.b16 %v2126
    %v2195 = vunpack.c.l.b16 %v2127
    %v2196 = vunpack.c.l.b16 %v2128
    %v2197 = vunpack.c.l.b16 %v2129
    %v2198 = vunpack.c.l.b16 %v2130
    %v2199 = vpack.c.b16 %v2168, %v2167
    %v2200 = vpack.c.b16 %v2170, %v2169
    %v2201 = vpack.c.b16 %v2172, %v2171
    %v2202 = vpack.c.b16 %v2174, %v2173
    %v2203 = vpack.c.b16 %v2176, %v2175
    %v2204 = vpack.c.b16 %v2178, %v2177
    %v2205 = vpack.c.b16 %v2180, %v2179
    %v2206 = vpack.c.b16 %v2182, %v2181
    %v2207 = vpack.c.b16 %v2184, %v2183
    %v2208 = vpack.c.b16 %v2186, %v2185
    %v2209 = vpack.c.b16 %v2188, %v2187
    %v2210 = vpack.c.b16 %v2190, %v2189
    %v2211 = vpack.c.b16 %v2192, %v2191
    %v2212 = vpack.c.b16 %v2194, %v2193
    %v2213 = vpack.c.b16 %v2196, %v2195
    %v2214 = vpack.c.b16 %v2198, %v2197
    %2231 = vmatprep.subr.bf16.mxu0 0
    %2232 = vmatpush1.bf16.msra.mxu0 %v2199
    %2233 = vmatprep.subr.bf16.mxu0 0
    %2234 = vmatpush1.bf16.msra.mxu0 %v2200
    %2235 = vmatprep.subr.bf16.mxu0 0
    %2236 = vmatpush1.bf16.msra.mxu0 %v2201
    %2237 = vmatprep.subr.bf16.mxu0 0
    %2238 = vmatpush1.bf16.msra.mxu0 %v2202
    %2239 = vmatprep.subr.bf16.mxu0 0
    %2240 = vmatpush1.bf16.msra.mxu0 %v2203
    %2241 = vmatprep.subr.bf16.mxu0 0
    %2242 = vmatpush1.bf16.msra.mxu0 %v2204
    %2243 = vmatprep.subr.bf16.mxu0 0
    %2244 = vmatpush1.bf16.msra.mxu0 %v2205
    %2245 = vmatprep.subr.bf16.mxu0 0
    %2246 = vmatpush1.bf16.msra.mxu0 %v2206
    %2247 = vmatprep.subr.bf16.mxu0 0
    %2248 = vmatpush1.bf16.msra.mxu0 %v2207
    %2249 = vmatprep.subr.bf16.mxu0 0
    %2250 = vmatpush1.bf16.msra.mxu0 %v2208
    %2251 = vmatprep.subr.bf16.mxu0 0
    %2252 = vmatpush1.bf16.msra.mxu0 %v2209
    %2253 = vmatprep.subr.bf16.mxu0 0
    %2254 = vmatpush1.bf16.msra.mxu0 %v2210
    %2255 = vmatprep.subr.bf16.mxu0 0
    %2256 = vmatpush1.bf16.msra.mxu0 %v2211
    %2257 = vmatprep.subr.bf16.mxu0 0
    %2258 = vmatpush1.bf16.msra.mxu0 %v2212
    %2259 = vmatprep.subr.bf16.mxu0 0
    %2260 = vmatpush1.bf16.msra.mxu0 %v2213
    %2261 = vmatprep.subr.bf16.mxu0 0
    %2262 = vmatpush1.bf16.msra.mxu0 %v2214
    %2263 = vmatprep.mubr.bf16.mxu0 %v2084
    %2264 = vmatmul.mubr.bf16.gmra.mrb[0].mxu0 %v2083
    %v2265 = vpop.f32.mrb[0].mxu0
    %v2266 = vadd.f32 %v2134, %v2265
    %v2267 = vpop.f32.mrb[0].mxu0
    %v2268 = vpop.f32.mrb[0].mxu0
    %v2269 = vadd.f32 %v2134, %v2268
    %v2270 = vpop.f32.mrb[0].mxu0
    %2271 = vmatprep.mubr.bf16.mxu0 %v2086
    %2272 = vmatmul.mubr.bf16.gmra.mrb[0].mxu0 %v2085
    %v2273 = vpop.f32.mrb[0].mxu0
    %v2274 = vadd.f32 %v2134, %v2273
    %v2275 = vpop.f32.mrb[0].mxu0
    %v2276 = vpop.f32.mrb[0].mxu0
    %v2277 = vadd.f32 %v2134, %v2276
    %v2278 = vpop.f32.mrb[0].mxu0
    %2279 = vmatprep.mubr.bf16.mxu0 %v2088
    %2280 = vmatmul.mubr.bf16.gmra.mrb[0].mxu0 %v2087
    %v2281 = vpop.f32.mrb[0].mxu0
    %v2282 = vadd.f32 %v2134, %v2281
    %v2283 = vpop.f32.mrb[0].mxu0
    %v2284 = vpop.f32.mrb[0].mxu0
    %v2285 = vadd.f32 %v2134, %v2284
    %v2286 = vpop.f32.mrb[0].mxu0
    %2287 = vmatprep.mubr.bf16.mxu0 %v2090
    %2288 = vmatmul.mubr.bf16.gmra.mrb[0].mxu0 %v2089
    %v2289 = vpop.f32.mrb[0].mxu0
    %v2290 = vadd.f32 %v2134, %v2289
    %v2291 = vpop.f32.mrb[0].mxu0
    %v2292 = vpop.f32.mrb[0].mxu0
    %v2293 = vadd.f32 %v2134, %v2292
    %v2294 = vpop.f32.mrb[0].mxu0
    %2295 = vmatprep.mubr.bf16.mxu0 %v2092
    %2296 = vmatmul.mubr.bf16.gmra.mrb[0].mxu0 %v2091
    %v2297 = vpop.f32.mrb[0].mxu0
    %v2298 = vadd.f32 %v2134, %v2297
    %v2299 = vpop.f32.mrb[0].mxu0
    %v2300 = vpop.f32.mrb[0].mxu0
    %v2301 = vadd.f32 %v2134, %v2300
    %v2302 = vpop.f32.mrb[0].mxu0
    %2303 = vmatprep.mubr.bf16.mxu0 %v2094
    %2304 = vmatmul.mubr.bf16.gmra.mrb[0].mxu0 %v2093
    %v2305 = vpop.f32.mrb[0].mxu0
    %v2306 = vadd.f32 %v2134, %v2305
    %v2307 = vpop.f32.mrb[0].mxu0
    %v2308 = vpop.f32.mrb[0].mxu0
    %v2309 = vadd.f32 %v2134, %v2308
    %v2310 = vpop.f32.mrb[0].mxu0
    %2311 = vmatprep.mubr.bf16.mxu0 %v2096
    %2312 = vmatmul.mubr.bf16.gmra.mrb[0].mxu0 %v2095
    %v2313 = vpop.f32.mrb[0].mxu0
    %v2314 = vadd.f32 %v2134, %v2313
    %v2315 = vpop.f32.mrb[0].mxu0
    %v2316 = vpop.f32.mrb[0].mxu0
    %v2317 = vadd.f32 %v2134, %v2316
    %v2318 = vpop.f32.mrb[0].mxu0
    %2319 = vmatprep.mubr.bf16.mxu0 %v2098
    %2320 = vmatmul.mubr.bf16.gmra.mrb[0].mxu0 %v2097
    %v2321 = vpop.f32.mrb[0].mxu0
    %v2322 = vadd.f32 %v2134, %v2321
    %v2323 = vpop.f32.mrb[0].mxu0
    %v2324 = vpop.f32.mrb[0].mxu0
    %v2325 = vadd.f32 %v2134, %v2324
    %v2326 = vpop.f32.mrb[0].mxu0
    %2327 = vdwg.mxu0
    %v2328 = vmax.f32 %v2266, 0.0
    %v2329 = vmax.f32 %v2269, 0.0
    %v2330 = vmax.f32 %v2274, 0.0
    %v2331 = vmax.f32 %v2277, 0.0
    %v2332 = vmax.f32 %v2282, 0.0
    %v2333 = vmax.f32 %v2285, 0.0
    %v2334 = vmax.f32 %v2290, 0.0
    %v2335 = vmax.f32 %v2293, 0.0
    %v2336 = vmax.f32 %v2298, 0.0
    %v2337 = vmax.f32 %v2301, 0.0
    %v2338 = vmax.f32 %v2306, 0.0
    %v2339 = vmax.f32 %v2309, 0.0
    %v2340 = vmax.f32 %v2314, 0.0
    %v2341 = vmax.f32 %v2317, 0.0
    %v2342 = vmax.f32 %v2322, 0.0
    %v2343 = vmax.f32 %v2325, 0.0
    %v2344 = vlaneseq
    %v2345 = vshrl.u32 %v2344, 7
    %v2346 = vsub.s32 2, %v2345
    %v2347 = vrot.slane %v1710, %v2346
    %v2348 = vmul.f32 %v2328, %v2347
    %v2349 = vmul.f32 %v2329, %v2347
    %v2350 = vmul.f32 %v2330, %v2347
    %v2351 = vmul.f32 %v2331, %v2347
    %v2352 = vmul.f32 %v2332, %v2347
    %v2353 = vmul.f32 %v2333, %v2347
    %v2354 = vmul.f32 %v2334, %v2347
    %v2355 = vmul.f32 %v2335, %v2347
    %v2356 = vmul.f32 %v2336, %v2347
    %v2357 = vmul.f32 %v2337, %v2347
    %v2358 = vmul.f32 %v2338, %v2347
    %v2359 = vmul.f32 %v2339, %v2347
    %v2360 = vmul.f32 %v2340, %v2347
    %v2361 = vmul.f32 %v2341, %v2347
    %v2362 = vmul.f32 %v2342, %v2347
    %v2363 = vmul.f32 %v2343, %v2347
    %2364 = vxpose.xlu0.b32.start [1/16] %v2348, 128
    %2365 = vxpose.xlu0.b32.cont [2/16] %v2349, 128
    %2366 = vxpose.xlu0.b32.cont [3/16] %v2350, 128
    %2367 = vxpose.xlu0.b32.cont [4/16] %v2351, 128
    %2368 = vxpose.xlu0.b32.cont [5/16] %v2352, 128
    %2369 = vxpose.xlu0.b32.cont [6/16] %v2353, 128
    %2370 = vxpose.xlu0.b32.cont [7/16] %v2354, 128
    %2371 = vxpose.xlu0.b32.cont [8/16] %v2355, 128
    %2372 = vxpose.xlu0.b32.cont [9/16] %v2356, 128
    %2373 = vxpose.xlu0.b32.cont [10/16] %v2357, 128
    %2374 = vxpose.xlu0.b32.cont [11/16] %v2358, 128
    %2375 = vxpose.xlu0.b32.cont [12/16] %v2359, 128
    %2376 = vxpose.xlu0.b32.cont [13/16] %v2360, 128
    %2377 = vxpose.xlu0.b32.cont [14/16] %v2361, 128
    %2378 = vxpose.xlu0.b32.cont [15/16] %v2362, 128
    %2379 = vxpose.xlu0.b32.end [16/16] %v2363, 128
    %v2380 = vpop.trf.xlu0
    %v2381 = vpop.trf.xlu0
    %v2382 = vpop.trf.xlu0
    %v2383 = vpop.trf.xlu0
    %v2384 = vpop.trf.xlu0
    %v2385 = vpop.trf.xlu0
    %v2386 = vpop.trf.xlu0
    %v2387 = vpop.trf.xlu0
    %v2388 = vpop.trf.xlu0
    %v2389 = vpop.trf.xlu0
    %v2390 = vpop.trf.xlu0
    %v2391 = vpop.trf.xlu0
    %v2392 = vpop.trf.xlu0
    %v2393 = vpop.trf.xlu0
    %v2394 = vpop.trf.xlu0
    %v2395 = vpop.trf.xlu0
    %v2396 = vadd.f32 %v2380, %v2381
    %v2397 = vadd.f32 %v2396, %v2382
    %v2398 = vadd.f32 %v2397, %v2383
    %v2399 = vadd.f32 %v2398, %v2384
    %v2400 = vadd.f32 %v2399, %v2385
    %v2401 = vadd.f32 %v2400, %v2386
    %v2402 = vadd.f32 %v2401, %v2387
    %v2403 = vadd.f32 %v2402, %v2388
    %v2404 = vadd.f32 %v2403, %v2389
    %v2405 = vadd.f32 %v2404, %v2390
    %v2406 = vadd.f32 %v2405, %v2391
    %v2407 = vadd.f32 %v2406, %v2392
    %v2408 = vadd.f32 %v2407, %v2393
    %v2409 = vadd.f32 %v2408, %v2394
    %v2410 = vadd.f32 %v2409, %v2395
    %v2411 = vrot.slane %v2410, 4
    %v2412 = vadd.f32 %v2410, %v2411
    %v2413 = vrot.slane %v2412, 2
    %v2414 = vadd.f32 %v2412, %v2413
    %v2415 = vrot.slane %v2414, 1
    %v2416 = vadd.f32 %v2414, %v2415
    %2417 = vset.pattern.permute.xlu0 0
    %2418 = vperm.xlu0 %2417, %v1710
    %v2419 = vpop.permute.xlu0 %2418
    %v2422 = vunpack.c.l.s4 839922192
    %v2423 = vunpack.c.0.s8 %v2422
    %v2424 = vlaneseq
    %v2425 = vshrl.u32 %v2424, 7
    %v2426 = vsub.s32 %v2423, %v2425
    %v2427 = vrot.slane %v2419, %v2426
    %v2429 = vlaneseq
    %v2430 = vshrl.u32 %v2429, 7
    %v2431 = vsub.s32 3, %v2430
    %v2432 = vrot.slane %v2427, %v2431
    %v2434 = vadd.f32 %v2416, %v2432
    %2435 = vst [vmem:[#allocation8] sm:$0x1] %v2434
    // Predicated region
    $region38: #{tpu_custom_call.1} parent=1 // pred_check
      _
    $region39: #{tpu_custom_call.1} parent=1 // pred_check_branch
      %2437 = sbr.rel (0) target = $region41
    $region40: #{tpu_custom_call.1} parent=1 // pred_region
      %s2439 = ssub.s32 16, 16
      %2440 = vsyncadd [#allocation4], %s2439
      %s2442 = sshll.u32 [#allocation8], 4
      %s2443 = int_to_ptr.vmem [resolvable:$true] %s2442
      %2445 = dma.vmem_to_hbm [thread:$0]  %s2443, 16, %s6, [#allocation4]
    $region41: #{tpu_custom_call.1} parent=1 // pred_fallthru
      _
    // Predicated region
    $region42: #{tpu_custom_call.1} parent=1 // pred_check
      _
    $region43: #{tpu_custom_call.1} parent=1 // pred_check_branch
      %2447 = sbr.rel (0) target = $region45
    $region44: #{tpu_custom_call.1} parent=1 // pred_region
      %2448 = dma.done [#allocation4], 16
    $region45: #{tpu_custom_call.1} parent=1 // pred_fallthru
      _
    %2449 = vsyncpa [#allocation3], 1
    %2450 = vsyncpa [#allocation6], 1
    %2451 = vsyncpa [#allocation4], 1

</llo_original>
